<compile_context>
chip_gen: v6e
topology: v6e:2x2x1
jax: 0.10.0
libtpu: 0.0.40
codegen_flags: <defaults>
</compile_context>

<pallas_src>
import functools

import jax
import jax.numpy as jnp
from jax.experimental import pallas as pl
from jax.experimental.pallas import tpu as pltpu

KS = 3          # conv kernel size
BN_EPS = 1e-5
C_OUT = 256
_LANE_PACK = 16  # bf16 sublane packing: keep L a multiple of this


def _round_up(x, m):
    return (x + m - 1) // m * m


def _vmem_capacity_bytes():
    """Physical VMEM of the local TPU; conservative 64 MiB (v7x) fallback."""
    try:
        return int(pltpu.get_tpu_info().vmem_capacity_bytes)
    except Exception:
        return 64 * 1024 * 1024


def _pick_batch_tile(n, lp, small_vmem):
    """Batch-block size: big tiles on 128 MiB parts (v5e/v6e) to amortize the
    ~0.35us per-grid-step overhead; smaller tiles and >=2 grid steps on 64 MiB
    parts (v7x) so both TensorCores get work and the working set fits VMEM."""
    max_rows = 2048 if small_vmem else 8192
    tb = max(1, min(n, max_rows // max(lp, 1)))
    if small_vmem and n >= 2:
        tb = min(tb, max(1, n // 2))
    while n % tb:
        tb -= 1
    return tb


def _make_fused_kernel(l_true):
    """Kernel factory; l_true = unpadded sequence length (static)."""

    def _layer(y, w_ref, s_ref, keep, out_dtype):
        """Conv1d(k=3, pad=1) + folded-BN shift + ReLU.

        y      : (TB, Lp, Cin) bf16 activation.
        w_ref  : (3*Cin, Cout) bf16 ref, taps [prev; center; next] on rows.
        s_ref  : (1, Cout) f32 ref (conv bias + BN shift folded).
        keep   : None or (1, Lp, 1) bool mask zeroing L-padding rows.
        """
        tb, lp, c = y.shape
        zero = jnp.zeros((tb, 1, c), y.dtype)
        # Neighbour taps via static slice + zero-row concat: the per-sequence
        # zero padding is structural, so no gate multiplies are needed.
        y_prev = jnp.concatenate([zero, y[:, : lp - 1, :]], axis=1)
        y_next = jnp.concatenate([y[:, 1:, :], zero], axis=1)
        # Single MXU matmul with all 3 taps concatenated on the lane axis
        # (fills the contraction depth; removes 2 f32 tap-accumulate adds).
        cat = jnp.concatenate([y_prev, y, y_next], axis=2)
        acc = jnp.dot(cat.reshape(tb * lp, 3 * c), w_ref[...],
                      preferred_element_type=jnp.float32)
        z = jnp.maximum(acc + s_ref[...], 0.0).reshape(tb, lp, -1)
        if keep is not None:           # re-zero L-padding rows (static branch)
            z = jnp.where(keep, z, 0.0)
        return z.astype(out_dtype)

    def kernel(x_ref, w1, s1, w2, s2, w3, s3, w4, s4, w5, s5, o_ref):
        tb, lp, _ = x_ref.shape
        bf16 = jnp.bfloat16
        x = x_ref[...].astype(bf16)    # bf16 activation path, f32 accumulation

        keep = None
        if lp != l_true:               # L was padded up to a sublane multiple
            pos = jax.lax.broadcasted_iota(jnp.int32, (lp, 1), 0)
            keep = (pos < l_true).reshape(1, lp, 1)

        y = _layer(x, w1, s1, keep, bf16)            # C_in ->  64
        y = _layer(y, w2, s2, keep, bf16)            #   64 -> 128
        y = _layer(y, w3, s3, keep, bf16)            #  128 -> 256
        y = _layer(y, w4, s4, keep, bf16)            #  256 -> 256
        y = _layer(y, w5, s5, None, o_ref.dtype)     #  256 -> 256 (pad rows
        o_ref[...] = y                               #  sliced off by wrapper)

    return kernel


def _convnet_forward_nlc(x_nlc, params, out_dtype, batch_block):
    n, l, cin = x_nlc.shape
    lp = _round_up(max(l, _LANE_PACK), _LANE_PACK)
    x = x_nlc.astype(jnp.float32)
    if lp != l:
        x = jnp.pad(x, ((0, 0), (0, lp - l), (0, 0)))

    small_vmem = _vmem_capacity_bytes() < 100 * 1024 * 1024
    tb = batch_block if batch_block is not None else _pick_batch_tile(
        n, lp, small_vmem)
    assert n % tb == 0, (n, tb)
    vmem_limit = (48 if small_vmem else 96) * 1024 * 1024

    args = [x]
    in_specs = [pl.BlockSpec((tb, lp, cin), lambda i: (i, 0, 0))]
    for w, shift in params:
        k, ci, co = w.shape
        # BN scale already folded into w; stack the 3 taps on the contraction
        # axis to match the in-kernel [prev | center | next] lane concat.
        args.append(w.reshape(k * ci, co).astype(jnp.bfloat16))
        args.append(shift.astype(jnp.float32))
        # TODO(synk): single-buffer these constant operands (pl.Buffered(1))
        # once verified on the target jax version; saves ~1 MiB VMEM on v7x.
        in_specs.append(pl.BlockSpec((k * ci, co), lambda i: (0, 0)))
        in_specs.append(pl.BlockSpec(shift.shape, lambda i: (0, 0)))

    out = pl.pallas_call(
        _make_fused_kernel(l),
        out_shape=jax.ShapeDtypeStruct((n, lp, C_OUT), out_dtype),
        grid=(n // tb,),
        in_specs=in_specs,
        out_specs=pl.BlockSpec((tb, lp, C_OUT), lambda i: (i, 0, 0)),
        compiler_params=pltpu.CompilerParams(
            dimension_semantics=("parallel",),
            vmem_limit_bytes=vmem_limit),
    )(*args)
    return out[:, :l, :]


@functools.partial(jax.jit, static_argnames=("out_dtype", "batch_block"))
def convnet_forward_nlc(x_nlc, params, *, out_dtype=jnp.float32,
                        batch_block=None):
    """Channels-last entry point: (N, L, C_in) -> (N, L, 256). Preferred: no
    HBM-level NCL<->NLC transposes around the kernel."""
    return _convnet_forward_nlc(x_nlc, params, out_dtype, batch_block)


@functools.partial(jax.jit, static_argnames=("out_dtype", "batch_block"))
def convnet_forward(x_ncl, params, *, out_dtype=jnp.float32, batch_block=None):
    """PyTorch-layout entry point: (N, C_in, L) -> (N, 256, L)."""
    # TODO(synk): these two transposes are full HBM round trips; keep the
    # surrounding model in NLC (convnet_forward_nlc) or fold the output
    # transpose into the kernel when L % 128 == 0.
    x_nlc = jnp.transpose(x_ncl, (0, 2, 1))
    y = _convnet_forward_nlc(x_nlc, params, out_dtype, batch_block)
    return jnp.transpose(y, (0, 2, 1))


def init_convnet_params(original_dim, seed=0):
    """Deterministic PyTorch-style init; eval-mode BN folded into (w, shift).

    NOTE (surfaced per review): BatchNorm is folded with default running stats
    (mean=0, var=1, gamma=1, beta=0); train-mode batch statistics or trained
    running stats would give different numbers.  layer23 (unused in forward)
    is omitted, so parameter counts differ from the PyTorch module.

    Returns list of (w, shift): w (3, Cin, Cout) f32 with BN scale folded in,
    shift (1, Cout) f32 = (bias - mean) * scale + beta (or bias if no BN).
    """
    channels = [(original_dim, 64),   # layer1
                (64, 128),            # layer2
                (128, 256),           # layer21
                (256, 256),           # layer22
                (256, 256)]           # layer3 (no BN)
    keys = jax.random.split(jax.random.PRNGKey(seed), len(channels))
    params = []
    for i, ((ci, co), k) in enumerate(zip(channels, keys)):
        kw, kb = jax.random.split(k)
        bound = 1.0 / float(ci * KS) ** 0.5
        # stored as (K, Cin, Cout); PyTorch stores (Cout, Cin, K)
        w = jax.random.uniform(kw, (KS, ci, co), jnp.float32, -bound, bound)
        b = jax.random.uniform(kb, (co,), jnp.float32, -bound, bound)
        if i < 4:
            gamma = jnp.ones((co,), jnp.float32)
            beta = jnp.zeros((co,), jnp.float32)
            mean = jnp.zeros((co,), jnp.float32)
            var = jnp.ones((co,), jnp.float32)
            scale = gamma / jnp.sqrt(var + BN_EPS)
            shift = (b - mean) * scale + beta
        else:
            scale = jnp.ones((co,), jnp.float32)
            shift = b
        params.append((w * scale[None, None, :], shift.reshape(1, co)))
    return params


def convnet_reference(x_ncl, params):
    """Pure-JAX (XLA) f32 reference using the identical folded-BN math."""
    y = jnp.transpose(x_ncl, (0, 2, 1))
    for w, shift in params:
        l = y.shape[1]
        yp = jnp.pad(y, ((0, 0), (1, 1), (0, 0)))
        acc = sum(jnp.einsum('nlc,cd->nld', yp[:, k:k + l, :], w[k])
                  for k in range(KS))
        y = jnp.maximum(acc + shift.reshape(1, 1, -1), 0.0)
    return jnp.transpose(y, (0, 2, 1))


if __name__ == "__main__":
    def _check(batch, original_dim, original_length, batch_block=None):
        key = jax.random.PRNGKey(0)
        x = jax.random.normal(key, (batch, original_dim, original_length),
                              dtype=jnp.float32)
        params = init_convnet_params(original_dim, seed=0)
        out = jax.block_until_ready(
            convnet_forward(x, params, batch_block=batch_block))
        ref = jax.block_until_ready(convnet_reference(x, params))
        assert out.shape == (batch, C_OUT, original_length), out.shape
        assert bool(jnp.all(jnp.isfinite(out)))
        assert bool(jnp.all(out >= 0.0))          # final ReLU
        rel_err = float(jnp.max(jnp.abs(out - ref)) /
                        (jnp.max(jnp.abs(ref)) + 1e-6))
        # bf16 activations + bf16 MXU with f32 accumulation across 5 layers.
        assert rel_err < 3e-2, rel_err
        return rel_err

    # Primary small case (matches the PyTorch module's intended usage).
    _check(batch=2, original_dim=4, original_length=16)
    # Multiple grid steps + L not a sublane multiple (pad/mask path).
    _check(batch=4, original_dim=8, original_length=20, batch_block=1)
    print("KERNEL_OK")
</pallas_src>

<mosaic_0001>
module attributes {stable_mosaic.version = 11 : i64} {
  func.func @kernel(%arg0: i32, %arg1: memref<1x16x4xf32, #tpu.memory_space<vmem>>, %arg2: memref<12x64xbf16, #tpu.memory_space<vmem>>, %arg3: memref<1x64xf32, #tpu.memory_space<vmem>>, %arg4: memref<192x128xbf16, #tpu.memory_space<vmem>>, %arg5: memref<1x128xf32, #tpu.memory_space<vmem>>, %arg6: memref<384x256xbf16, #tpu.memory_space<vmem>>, %arg7: memref<1x256xf32, #tpu.memory_space<vmem>>, %arg8: memref<768x256xbf16, #tpu.memory_space<vmem>>, %arg9: memref<1x256xf32, #tpu.memory_space<vmem>>, %arg10: memref<768x256xbf16, #tpu.memory_space<vmem>>, %arg11: memref<1x256xf32, #tpu.memory_space<vmem>>, %arg12: memref<1x16x256xf32, #tpu.memory_space<vmem>>) attributes {dimension_semantics = [#tpu.dimension_semantics<parallel>], iteration_bounds = array<i64: 2>, scalar_prefetch = 0 : i64, scratch_operands = 0 : i64, tpu.core_type = #tpu.core_type<tc>, window_params = [{transform_indices = @transform_0, window_bounds = array<i64: 1, 16, 4>}, {pipeline_mode = #tpu.pipeline_mode<synchronous>, transform_indices = @transform_1, window_bounds = array<i64: 12, 64>}, {pipeline_mode = #tpu.pipeline_mode<synchronous>, transform_indices = @transform_2, window_bounds = array<i64: 1, 64>}, {pipeline_mode = #tpu.pipeline_mode<synchronous>, transform_indices = @transform_3, window_bounds = array<i64: 192, 128>}, {pipeline_mode = #tpu.pipeline_mode<synchronous>, transform_indices = @transform_4, window_bounds = array<i64: 1, 128>}, {pipeline_mode = #tpu.pipeline_mode<synchronous>, transform_indices = @transform_5, window_bounds = array<i64: 384, 256>}, {pipeline_mode = #tpu.pipeline_mode<synchronous>, transform_indices = @transform_6, window_bounds = array<i64: 1, 256>}, {pipeline_mode = #tpu.pipeline_mode<synchronous>, transform_indices = @transform_7, window_bounds = array<i64: 768, 256>}, {pipeline_mode = #tpu.pipeline_mode<synchronous>, transform_indices = @transform_8, window_bounds = array<i64: 1, 256>}, {pipeline_mode = #tpu.pipeline_mode<synchronous>, transform_indices = @transform_9, window_bounds = array<i64: 768, 256>}, {pipeline_mode = #tpu.pipeline_mode<synchronous>, transform_indices = @transform_10, window_bounds = array<i64: 1, 256>}, {transform_indices = @transform_11, window_bounds = array<i64: 1, 16, 256>}]} {
    %c0 = arith.constant 0 : index
    %c0_0 = arith.constant 0 : index
    %c0_1 = arith.constant 0 : index
    %0 = vector.load %arg1[%c0, %c0_0, %c0_1] : memref<1x16x4xf32, #tpu.memory_space<vmem>>, vector<1x16x4xf32>
    %1 = arith.truncf %0 : vector<1x16x4xf32> to vector<1x16x4xbf16>
    %cst = arith.constant 0.000000e+00 : bf16
    %2 = vector.broadcast %cst : bf16 to vector<1x1x4xbf16>
    %3 = vector.extract_strided_slice %1 {offsets = [0, 0, 0], sizes = [1, 15, 4], strides = [1, 1, 1]} : vector<1x16x4xbf16> to vector<1x15x4xbf16>
    %4 = tpu.concatenate %2, %3 in 1 : vector<1x1x4xbf16>, vector<1x15x4xbf16> -> vector<1x16x4xbf16>
    %5 = vector.extract_strided_slice %1 {offsets = [0, 1, 0], sizes = [1, 15, 4], strides = [1, 1, 1]} : vector<1x16x4xbf16> to vector<1x15x4xbf16>
    %6 = tpu.concatenate %5, %2 in 1 : vector<1x15x4xbf16>, vector<1x1x4xbf16> -> vector<1x16x4xbf16>
    %7 = tpu.concatenate %4, %1, %6 in 2 : vector<1x16x4xbf16>, vector<1x16x4xbf16>, vector<1x16x4xbf16> -> vector<1x16x12xbf16>
    %8 = vector.shape_cast %7 : vector<1x16x12xbf16> to vector<16x12xbf16>
    %c0_2 = arith.constant 0 : index
    %c0_3 = arith.constant 0 : index
    %9 = vector.load %arg2[%c0_2, %c0_3] : memref<12x64xbf16, #tpu.memory_space<vmem>>, vector<12x64xbf16>
    %cst_4 = arith.constant dense<0.000000e+00> : vector<16x64xf32>
    %10 = tpu.matmul %8, %9, %cst_4 {dimension_numbers = #tpu.dot_dimension_numbers<[1], [0], [0], [1], [0, 0, 1, 1], [], []>} : vector<16x12xbf16>, vector<12x64xbf16>, vector<16x64xf32> -> vector<16x64xf32>
    %c0_5 = arith.constant 0 : index
    %c0_6 = arith.constant 0 : index
    %11 = vector.load %arg3[%c0_5, %c0_6] : memref<1x64xf32, #tpu.memory_space<vmem>>, vector<1x64xf32>
    %12 = vector.broadcast %11 : vector<1x64xf32> to vector<16x64xf32>
    %13 = arith.addf %10, %12 : vector<16x64xf32>
    %cst_7 = arith.constant 0.000000e+00 : f32
    %14 = vector.broadcast %cst_7 : f32 to vector<16x64xf32>
    %15 = arith.maximumf %13, %14 : vector<16x64xf32>
    %16 = vector.shape_cast %15 : vector<16x64xf32> to vector<1x16x64xf32>
    %17 = arith.truncf %16 : vector<1x16x64xf32> to vector<1x16x64xbf16>
    %cst_8 = arith.constant 0.000000e+00 : bf16
    %18 = vector.broadcast %cst_8 : bf16 to vector<1x1x64xbf16>
    %19 = vector.extract_strided_slice %17 {offsets = [0, 0, 0], sizes = [1, 15, 64], strides = [1, 1, 1]} : vector<1x16x64xbf16> to vector<1x15x64xbf16>
    %20 = tpu.concatenate %18, %19 in 1 : vector<1x1x64xbf16>, vector<1x15x64xbf16> -> vector<1x16x64xbf16>
    %21 = vector.extract_strided_slice %17 {offsets = [0, 1, 0], sizes = [1, 15, 64], strides = [1, 1, 1]} : vector<1x16x64xbf16> to vector<1x15x64xbf16>
    %22 = tpu.concatenate %21, %18 in 1 : vector<1x15x64xbf16>, vector<1x1x64xbf16> -> vector<1x16x64xbf16>
    %23 = tpu.concatenate %20, %17, %22 in 2 : vector<1x16x64xbf16>, vector<1x16x64xbf16>, vector<1x16x64xbf16> -> vector<1x16x192xbf16>
    %24 = vector.shape_cast %23 : vector<1x16x192xbf16> to vector<16x192xbf16>
    %c0_9 = arith.constant 0 : index
    %c0_10 = arith.constant 0 : index
    %25 = vector.load %arg4[%c0_9, %c0_10] : memref<192x128xbf16, #tpu.memory_space<vmem>>, vector<192x128xbf16>
    %cst_11 = arith.constant dense<0.000000e+00> : vector<16x128xf32>
    %26 = tpu.matmul %24, %25, %cst_11 {dimension_numbers = #tpu.dot_dimension_numbers<[1], [0], [0], [1], [0, 0, 1, 1], [], []>} : vector<16x192xbf16>, vector<192x128xbf16>, vector<16x128xf32> -> vector<16x128xf32>
    %c0_12 = arith.constant 0 : index
    %c0_13 = arith.constant 0 : index
    %27 = vector.load %arg5[%c0_12, %c0_13] : memref<1x128xf32, #tpu.memory_space<vmem>>, vector<1x128xf32>
    %28 = vector.broadcast %27 : vector<1x128xf32> to vector<16x128xf32>
    %29 = arith.addf %26, %28 : vector<16x128xf32>
    %cst_14 = arith.constant 0.000000e+00 : f32
    %30 = vector.broadcast %cst_14 : f32 to vector<16x128xf32>
    %31 = arith.maximumf %29, %30 : vector<16x128xf32>
    %32 = vector.shape_cast %31 : vector<16x128xf32> to vector<1x16x128xf32>
    %33 = arith.truncf %32 : vector<1x16x128xf32> to vector<1x16x128xbf16>
    %cst_15 = arith.constant 0.000000e+00 : bf16
    %34 = vector.broadcast %cst_15 : bf16 to vector<1x1x128xbf16>
    %35 = vector.extract_strided_slice %33 {offsets = [0, 0, 0], sizes = [1, 15, 128], strides = [1, 1, 1]} : vector<1x16x128xbf16> to vector<1x15x128xbf16>
    %36 = tpu.concatenate %34, %35 in 1 : vector<1x1x128xbf16>, vector<1x15x128xbf16> -> vector<1x16x128xbf16>
    %37 = vector.extract_strided_slice %33 {offsets = [0, 1, 0], sizes = [1, 15, 128], strides = [1, 1, 1]} : vector<1x16x128xbf16> to vector<1x15x128xbf16>
    %38 = tpu.concatenate %37, %34 in 1 : vector<1x15x128xbf16>, vector<1x1x128xbf16> -> vector<1x16x128xbf16>
    %39 = tpu.concatenate %36, %33, %38 in 2 : vector<1x16x128xbf16>, vector<1x16x128xbf16>, vector<1x16x128xbf16> -> vector<1x16x384xbf16>
    %40 = vector.shape_cast %39 : vector<1x16x384xbf16> to vector<16x384xbf16>
    %c0_16 = arith.constant 0 : index
    %c0_17 = arith.constant 0 : index
    %41 = vector.load %arg6[%c0_16, %c0_17] : memref<384x256xbf16, #tpu.memory_space<vmem>>, vector<384x256xbf16>
    %cst_18 = arith.constant dense<0.000000e+00> : vector<16x256xf32>
    %42 = tpu.matmul %40, %41, %cst_18 {dimension_numbers = #tpu.dot_dimension_numbers<[1], [0], [0], [1], [0, 0, 1, 1], [], []>} : vector<16x384xbf16>, vector<384x256xbf16>, vector<16x256xf32> -> vector<16x256xf32>
    %c0_19 = arith.constant 0 : index
    %c0_20 = arith.constant 0 : index
    %43 = vector.load %arg7[%c0_19, %c0_20] : memref<1x256xf32, #tpu.memory_space<vmem>>, vector<1x256xf32>
    %44 = vector.broadcast %43 : vector<1x256xf32> to vector<16x256xf32>
    %45 = arith.addf %42, %44 : vector<16x256xf32>
    %cst_21 = arith.constant 0.000000e+00 : f32
    %46 = vector.broadcast %cst_21 : f32 to vector<16x256xf32>
    %47 = arith.maximumf %45, %46 : vector<16x256xf32>
    %48 = vector.shape_cast %47 : vector<16x256xf32> to vector<1x16x256xf32>
    %49 = arith.truncf %48 : vector<1x16x256xf32> to vector<1x16x256xbf16>
    %cst_22 = arith.constant 0.000000e+00 : bf16
    %50 = vector.broadcast %cst_22 : bf16 to vector<1x1x256xbf16>
    %51 = vector.extract_strided_slice %49 {offsets = [0, 0, 0], sizes = [1, 15, 256], strides = [1, 1, 1]} : vector<1x16x256xbf16> to vector<1x15x256xbf16>
    %52 = tpu.concatenate %50, %51 in 1 : vector<1x1x256xbf16>, vector<1x15x256xbf16> -> vector<1x16x256xbf16>
    %53 = vector.extract_strided_slice %49 {offsets = [0, 1, 0], sizes = [1, 15, 256], strides = [1, 1, 1]} : vector<1x16x256xbf16> to vector<1x15x256xbf16>
    %54 = tpu.concatenate %53, %50 in 1 : vector<1x15x256xbf16>, vector<1x1x256xbf16> -> vector<1x16x256xbf16>
    %55 = tpu.concatenate %52, %49, %54 in 2 : vector<1x16x256xbf16>, vector<1x16x256xbf16>, vector<1x16x256xbf16> -> vector<1x16x768xbf16>
    %56 = vector.shape_cast %55 : vector<1x16x768xbf16> to vector<16x768xbf16>
    %c0_23 = arith.constant 0 : index
    %c0_24 = arith.constant 0 : index
    %57 = vector.load %arg8[%c0_23, %c0_24] : memref<768x256xbf16, #tpu.memory_space<vmem>>, vector<768x256xbf16>
    %cst_25 = arith.constant dense<0.000000e+00> : vector<16x256xf32>
    %58 = tpu.matmul %56, %57, %cst_25 {dimension_numbers = #tpu.dot_dimension_numbers<[1], [0], [0], [1], [0, 0, 1, 1], [], []>} : vector<16x768xbf16>, vector<768x256xbf16>, vector<16x256xf32> -> vector<16x256xf32>
    %c0_26 = arith.constant 0 : index
    %c0_27 = arith.constant 0 : index
    %59 = vector.load %arg9[%c0_26, %c0_27] : memref<1x256xf32, #tpu.memory_space<vmem>>, vector<1x256xf32>
    %60 = vector.broadcast %59 : vector<1x256xf32> to vector<16x256xf32>
    %61 = arith.addf %58, %60 : vector<16x256xf32>
    %cst_28 = arith.constant 0.000000e+00 : f32
    %62 = vector.broadcast %cst_28 : f32 to vector<16x256xf32>
    %63 = arith.maximumf %61, %62 : vector<16x256xf32>
    %64 = vector.shape_cast %63 : vector<16x256xf32> to vector<1x16x256xf32>
    %65 = arith.truncf %64 : vector<1x16x256xf32> to vector<1x16x256xbf16>
    %cst_29 = arith.constant 0.000000e+00 : bf16
    %66 = vector.broadcast %cst_29 : bf16 to vector<1x1x256xbf16>
    %67 = vector.extract_strided_slice %65 {offsets = [0, 0, 0], sizes = [1, 15, 256], strides = [1, 1, 1]} : vector<1x16x256xbf16> to vector<1x15x256xbf16>
    %68 = tpu.concatenate %66, %67 in 1 : vector<1x1x256xbf16>, vector<1x15x256xbf16> -> vector<1x16x256xbf16>
    %69 = vector.extract_strided_slice %65 {offsets = [0, 1, 0], sizes = [1, 15, 256], strides = [1, 1, 1]} : vector<1x16x256xbf16> to vector<1x15x256xbf16>
    %70 = tpu.concatenate %69, %66 in 1 : vector<1x15x256xbf16>, vector<1x1x256xbf16> -> vector<1x16x256xbf16>
    %71 = tpu.concatenate %68, %65, %70 in 2 : vector<1x16x256xbf16>, vector<1x16x256xbf16>, vector<1x16x256xbf16> -> vector<1x16x768xbf16>
    %72 = vector.shape_cast %71 : vector<1x16x768xbf16> to vector<16x768xbf16>
    %c0_30 = arith.constant 0 : index
    %c0_31 = arith.constant 0 : index
    %73 = vector.load %arg10[%c0_30, %c0_31] : memref<768x256xbf16, #tpu.memory_space<vmem>>, vector<768x256xbf16>
    %cst_32 = arith.constant dense<0.000000e+00> : vector<16x256xf32>
    %74 = tpu.matmul %72, %73, %cst_32 {dimension_numbers = #tpu.dot_dimension_numbers<[1], [0], [0], [1], [0, 0, 1, 1], [], []>} : vector<16x768xbf16>, vector<768x256xbf16>, vector<16x256xf32> -> vector<16x256xf32>
    %c0_33 = arith.constant 0 : index
    %c0_34 = arith.constant 0 : index
    %75 = vector.load %arg11[%c0_33, %c0_34] : memref<1x256xf32, #tpu.memory_space<vmem>>, vector<1x256xf32>
    %76 = vector.broadcast %75 : vector<1x256xf32> to vector<16x256xf32>
    %77 = arith.addf %74, %76 : vector<16x256xf32>
    %cst_35 = arith.constant 0.000000e+00 : f32
    %78 = vector.broadcast %cst_35 : f32 to vector<16x256xf32>
    %79 = arith.maximumf %77, %78 : vector<16x256xf32>
    %80 = vector.shape_cast %79 : vector<16x256xf32> to vector<1x16x256xf32>
    %c0_36 = arith.constant 0 : index
    %c0_37 = arith.constant 0 : index
    %c0_38 = arith.constant 0 : index
    %81 = vector.load %arg12[%c0_36, %c0_37, %c0_38] : memref<1x16x256xf32, #tpu.memory_space<vmem>>, vector<1x16x256xf32>
    tpu.vector_store %arg12[%c0_36, %c0_37, %c0_38], %80 {strides = array<i32>} : memref<1x16x256xf32, #tpu.memory_space<vmem>>, vector<1x16x256xf32>,
    return
  }
  func.func @transform_0(%arg0: i32) -> (i32, i32, i32) {
    %c0_i32 = arith.constant 0 : i32
    %c0_i32_0 = arith.constant 0 : i32
    %c0_i32_1 = arith.constant 0 : i32
    return %arg0, %c0_i32, %c0_i32_0 : i32, i32, i32
  }
  func.func @transform_1(%arg0: i32) -> (i32, i32) {
    %c0_i32 = arith.constant 0 : i32
    %c0_i32_0 = arith.constant 0 : i32
    %c0_i32_1 = arith.constant 0 : i32
    return %c0_i32, %c0_i32_0 : i32, i32
  }
  func.func @transform_2(%arg0: i32) -> (i32, i32) {
    %c0_i32 = arith.constant 0 : i32
    %c0_i32_0 = arith.constant 0 : i32
    %c0_i32_1 = arith.constant 0 : i32
    return %c0_i32, %c0_i32_0 : i32, i32
  }
  func.func @transform_3(%arg0: i32) -> (i32, i32) {
    %c0_i32 = arith.constant 0 : i32
    %c0_i32_0 = arith.constant 0 : i32
    %c0_i32_1 = arith.constant 0 : i32
    return %c0_i32, %c0_i32_0 : i32, i32
  }
  func.func @transform_4(%arg0: i32) -> (i32, i32) {
    %c0_i32 = arith.constant 0 : i32
    %c0_i32_0 = arith.constant 0 : i32
    %c0_i32_1 = arith.constant 0 : i32
    return %c0_i32, %c0_i32_0 : i32, i32
  }
  func.func @transform_5(%arg0: i32) -> (i32, i32) {
    %c0_i32 = arith.constant 0 : i32
    %c0_i32_0 = arith.constant 0 : i32
    %c0_i32_1 = arith.constant 0 : i32
    return %c0_i32, %c0_i32_0 : i32, i32
  }
  func.func @transform_6(%arg0: i32) -> (i32, i32) {
    %c0_i32 = arith.constant 0 : i32
    %c0_i32_0 = arith.constant 0 : i32
    %c0_i32_1 = arith.constant 0 : i32
    return %c0_i32, %c0_i32_0 : i32, i32
  }
  func.func @transform_7(%arg0: i32) -> (i32, i32) {
    %c0_i32 = arith.constant 0 : i32
    %c0_i32_0 = arith.constant 0 : i32
    %c0_i32_1 = arith.constant 0 : i32
    return %c0_i32, %c0_i32_0 : i32, i32
  }
  func.func @transform_8(%arg0: i32) -> (i32, i32) {
    %c0_i32 = arith.constant 0 : i32
    %c0_i32_0 = arith.constant 0 : i32
    %c0_i32_1 = arith.constant 0 : i32
    return %c0_i32, %c0_i32_0 : i32, i32
  }
  func.func @transform_9(%arg0: i32) -> (i32, i32) {
    %c0_i32 = arith.constant 0 : i32
    %c0_i32_0 = arith.constant 0 : i32
    %c0_i32_1 = arith.constant 0 : i32
    return %c0_i32, %c0_i32_0 : i32, i32
  }
  func.func @transform_10(%arg0: i32) -> (i32, i32) {
    %c0_i32 = arith.constant 0 : i32
    %c0_i32_0 = arith.constant 0 : i32
    %c0_i32_1 = arith.constant 0 : i32
    return %c0_i32, %c0_i32_0 : i32, i32
  }
  func.func @transform_11(%arg0: i32) -> (i32, i32, i32) {
    %c0_i32 = arith.constant 0 : i32
    %c0_i32_0 = arith.constant 0 : i32
    %c0_i32_1 = arith.constant 0 : i32
    return %arg0, %c0_i32, %c0_i32_0 : i32, i32, i32
  }
}

</mosaic_0001>

<llo_original>
// kernel: convnet_forward.1
$region0: #{convnet_forward.1}
  #allocation0 [shape = 'u32[]', space=smem, size = 0x4, offset = 0x4, fixed_abs, tag = 'smem constant byte address 0x4 - core index']
  #allocation1 [shape = 'u32[144,128]{1,0:T(1,128)}', space=vmem, size = 0x12000, scoped, tag = 'internal scratch']
  %s0 = inlined_call_operand.vmem [shape: f32[2,16,4], index: 0, kind: input, shape index: {}]
  %s1 = inlined_call_operand.vmem [shape: bf16[12,64], index: 1, kind: input, shape index: {}]
  %s2 = inlined_call_operand.vmem [shape: f32[1,64], index: 2, kind: input, shape index: {}]
  %s3 = inlined_call_operand.vmem [shape: bf16[192,128], index: 3, kind: input, shape index: {}]
  %s4 = inlined_call_operand.vmem [shape: f32[1,128], index: 4, kind: input, shape index: {}]
  %s5 = inlined_call_operand.vmem [shape: bf16[384,256], index: 5, kind: input, shape index: {}]
  %s6 = inlined_call_operand.vmem [shape: f32[1,256], index: 6, kind: input, shape index: {}]
  %s7 = inlined_call_operand.vmem [shape: bf16[768,256], index: 7, kind: input, shape index: {}]
  %s8 = inlined_call_operand.vmem [shape: f32[1,256], index: 8, kind: input, shape index: {}]
  %s9 = inlined_call_operand.vmem [shape: bf16[768,256], index: 9, kind: input, shape index: {}]
  %s10 = inlined_call_operand.vmem [shape: f32[1,256], index: 10, kind: input, shape index: {}]
  %s11 = inlined_call_operand.hbm [shape: f32[2,16,256], index: 11, kind: output, shape index: {}]
  %s12 = sld [smem:[#allocation0]]
  $region77: #{convnet_forward.1} parent=0
    _
  %s14 = ssub.s32 1, %s12
  %s15 = scalar_select 0, %s14, %s12
  $region1: #{convnet_forward.1} parent=0
    #allocation2 [shape = 'u8[32768]{0}', space=vmem, size = 0x8000, scoped, tag = 'output window, operand 0']
    #allocation3 [shape = 's32[2]{0}', space=sflag, size = 0x8, scoped, tag = 'scoped memory for convnet_forward.1']
    %16 = vsyncpa [#allocation3], 0
    %s17 = scalar_lea.sflag [#allocation3], 1
    %18 = vsyncpa %s17, 0
    loop: start=0, step=1, limit=4
    $region2: #{convnet_forward.1} parent=1 // loop_pre_header
      _
    $region3: #{convnet_forward.1} parent=1 // loop_header
      %s20 = sphi 0, %s24
      %p21 = scmp.ge.s32.totalorder %s20, 4
      %s30 = sphi 0, %s32
      %s33 = sphi 0, %s30
      %s34 = sphi 0, %s33
      %s50 = sphi 0, %s34
      %s54 = sphi 0, %s54
      %s56 = sphi 0, %s54
      %s57 = sphi 0, %s56
      %s71 = sphi 0, %s57
      %s75 = sphi 0, %s75
      %s77 = sphi 0, %s75
      %s78 = sphi 0, %s77
      %s92 = sphi 0, %s78
      %s96 = sphi 0, %s96
      %s98 = sphi 0, %s96
      %s99 = sphi 0, %s98
      %s113 = sphi 0, %s99
      %s117 = sphi 0, %s117
      %s119 = sphi 0, %s117
      %s120 = sphi 0, %s119
      %s134 = sphi 0, %s120
      %s138 = sphi 0, %s138
      %s140 = sphi 0, %s138
      %s141 = sphi 0, %s140
      %s155 = sphi 0, %s141
      %s159 = sphi 0, %s159
      %s161 = sphi 0, %s159
      %s162 = sphi 0, %s161
      %s176 = sphi 0, %s162
      %s180 = sphi 0, %s180
      %s182 = sphi 0, %s180
      %s183 = sphi 0, %s182
      %s197 = sphi 0, %s183
      %s201 = sphi 0, %s201
      %s203 = sphi 0, %s201
      %s204 = sphi 0, %s203
      %s218 = sphi 0, %s204
      %s222 = sphi 0, %s222
      %s224 = sphi 0, %s222
      %s225 = sphi 0, %s224
      %s239 = sphi 0, %s225
      %s243 = sphi 0, %s243
      %s245 = sphi 0, %s243
      %s246 = sphi 0, %s245
      %s260 = sphi 0, %s246
      %s266 = sphi 0, %s268
      %s269 = sphi 0, %s266
      %s270 = sphi 0, %s269
      %s286 = sphi 0, %s270
    $region4: #{convnet_forward.1} parent=1 // loop_header_branch
      %23 = sbr.rel (%p21) target = $region8
    $region5: #{convnet_forward.1} parent=1 // loop_body
      %s25 = ssub.s32 %s20, 1
      %s26 = ssub.s32 %s20, 2
      %s27 = sadd.s32 %s20, 1
      %s28 = ssub.s32 %s20, %s27
      %p29 = scmp.eq.s32.totalorder %s28, 0
      %s31 = sadd.s32 %s30, 1
      %s32 = scalar_select %p29, %s30, %s31
      %p35 = pneg %p29
      %p36 = scmp.eq.s32.totalorder %s20, 1
      %p37 = por %p35, %p36
      %p38 = scmp.ne.s32.totalorder %s30, %s33
      %p39 = scmp.eq.s32.totalorder %s20, 0
      %p40 = por %p38, %p39
      %p41 = scmp.ne.s32.totalorder %s30, %s33
      %p42 = scmp.eq.s32.totalorder %s25, 1
      %p43 = por %p41, %p42
      %p44 = scmp.ne.s32.totalorder %s33, %s34
      %p45 = scmp.eq.s32.totalorder %s25, 0
      %p46 = por %p44, %p45
      %p47 = scmp.ne.s32.totalorder %s33, %s34
      %p48 = scmp.eq.s32.totalorder %s26, 1
      %p49 = por %p47, %p48
      %p51 = scmp.ne.s32.totalorder %s34, %s50
      %p52 = scmp.eq.s32.totalorder %s26, 0
      %p53 = por %p51, %p52
      %s55 = sadd.s32 %s54, 1
      %p58 = scmp.eq.s32.totalorder %s20, 1
      %p59 = scmp.ne.s32.totalorder %s54, %s56
      %p60 = scmp.eq.s32.totalorder %s20, 0
      %p61 = por %p59, %p60
      %p62 = scmp.ne.s32.totalorder %s54, %s56
      %p63 = scmp.eq.s32.totalorder %s25, 1
      %p64 = por %p62, %p63
      %p65 = scmp.ne.s32.totalorder %s56, %s57
      %p66 = scmp.eq.s32.totalorder %s25, 0
      %p67 = por %p65, %p66
      %p68 = scmp.ne.s32.totalorder %s56, %s57
      %p69 = scmp.eq.s32.totalorder %s26, 1
      %p70 = por %p68, %p69
      %p72 = scmp.ne.s32.totalorder %s57, %s71
      %p73 = scmp.eq.s32.totalorder %s26, 0
      %p74 = por %p72, %p73
      %s76 = sadd.s32 %s75, 1
      %p79 = scmp.eq.s32.totalorder %s20, 1
      %p80 = scmp.ne.s32.totalorder %s75, %s77
      %p81 = scmp.eq.s32.totalorder %s20, 0
      %p82 = por %p80, %p81
      %p83 = scmp.ne.s32.totalorder %s75, %s77
      %p84 = scmp.eq.s32.totalorder %s25, 1
      %p85 = por %p83, %p84
      %p86 = scmp.ne.s32.totalorder %s77, %s78
      %p87 = scmp.eq.s32.totalorder %s25, 0
      %p88 = por %p86, %p87
      %p89 = scmp.ne.s32.totalorder %s77, %s78
      %p90 = scmp.eq.s32.totalorder %s26, 1
      %p91 = por %p89, %p90
      %p93 = scmp.ne.s32.totalorder %s78, %s92
      %p94 = scmp.eq.s32.totalorder %s26, 0
      %p95 = por %p93, %p94
      %s97 = sadd.s32 %s96, 1
      %p100 = scmp.eq.s32.totalorder %s20, 1
      %p101 = scmp.ne.s32.totalorder %s96, %s98
      %p102 = scmp.eq.s32.totalorder %s20, 0
      %p103 = por %p101, %p102
      %p104 = scmp.ne.s32.totalorder %s96, %s98
      %p105 = scmp.eq.s32.totalorder %s25, 1
      %p106 = por %p104, %p105
      %p107 = scmp.ne.s32.totalorder %s98, %s99
      %p108 = scmp.eq.s32.totalorder %s25, 0
      %p109 = por %p107, %p108
      %p110 = scmp.ne.s32.totalorder %s98, %s99
      %p111 = scmp.eq.s32.totalorder %s26, 1
      %p112 = por %p110, %p111
      %p114 = scmp.ne.s32.totalorder %s99, %s113
      %p115 = scmp.eq.s32.totalorder %s26, 0
      %p116 = por %p114, %p115
      %s118 = sadd.s32 %s117, 1
      %p121 = scmp.eq.s32.totalorder %s20, 1
      %p122 = scmp.ne.s32.totalorder %s117, %s119
      %p123 = scmp.eq.s32.totalorder %s20, 0
      %p124 = por %p122, %p123
      %p125 = scmp.ne.s32.totalorder %s117, %s119
      %p126 = scmp.eq.s32.totalorder %s25, 1
      %p127 = por %p125, %p126
      %p128 = scmp.ne.s32.totalorder %s119, %s120
      %p129 = scmp.eq.s32.totalorder %s25, 0
      %p130 = por %p128, %p129
      %p131 = scmp.ne.s32.totalorder %s119, %s120
      %p132 = scmp.eq.s32.totalorder %s26, 1
      %p133 = por %p131, %p132
      %p135 = scmp.ne.s32.totalorder %s120, %s134
      %p136 = scmp.eq.s32.totalorder %s26, 0
      %p137 = por %p135, %p136
      %s139 = sadd.s32 %s138, 1
      %p142 = scmp.eq.s32.totalorder %s20, 1
      %p143 = scmp.ne.s32.totalorder %s138, %s140
      %p144 = scmp.eq.s32.totalorder %s20, 0
      %p145 = por %p143, %p144
      %p146 = scmp.ne.s32.totalorder %s138, %s140
      %p147 = scmp.eq.s32.totalorder %s25, 1
      %p148 = por %p146, %p147
      %p149 = scmp.ne.s32.totalorder %s140, %s141
      %p150 = scmp.eq.s32.totalorder %s25, 0
      %p151 = por %p149, %p150
      %p152 = scmp.ne.s32.totalorder %s140, %s141
      %p153 = scmp.eq.s32.totalorder %s26, 1
      %p154 = por %p152, %p153
      %p156 = scmp.ne.s32.totalorder %s141, %s155
      %p157 = scmp.eq.s32.totalorder %s26, 0
      %p158 = por %p156, %p157
      %s160 = sadd.s32 %s159, 1
      %p163 = scmp.eq.s32.totalorder %s20, 1
      %p164 = scmp.ne.s32.totalorder %s159, %s161
      %p165 = scmp.eq.s32.totalorder %s20, 0
      %p166 = por %p164, %p165
      %p167 = scmp.ne.s32.totalorder %s159, %s161
      %p168 = scmp.eq.s32.totalorder %s25, 1
      %p169 = por %p167, %p168
      %p170 = scmp.ne.s32.totalorder %s161, %s162
      %p171 = scmp.eq.s32.totalorder %s25, 0
      %p172 = por %p170, %p171
      %p173 = scmp.ne.s32.totalorder %s161, %s162
      %p174 = scmp.eq.s32.totalorder %s26, 1
      %p175 = por %p173, %p174
      %p177 = scmp.ne.s32.totalorder %s162, %s176
      %p178 = scmp.eq.s32.totalorder %s26, 0
      %p179 = por %p177, %p178
      %s181 = sadd.s32 %s180, 1
      %p184 = scmp.eq.s32.totalorder %s20, 1
      %p185 = scmp.ne.s32.totalorder %s180, %s182
      %p186 = scmp.eq.s32.totalorder %s20, 0
      %p187 = por %p185, %p186
      %p188 = scmp.ne.s32.totalorder %s180, %s182
      %p189 = scmp.eq.s32.totalorder %s25, 1
      %p190 = por %p188, %p189
      %p191 = scmp.ne.s32.totalorder %s182, %s183
      %p192 = scmp.eq.s32.totalorder %s25, 0
      %p193 = por %p191, %p192
      %p194 = scmp.ne.s32.totalorder %s182, %s183
      %p195 = scmp.eq.s32.totalorder %s26, 1
      %p196 = por %p194, %p195
      %p198 = scmp.ne.s32.totalorder %s183, %s197
      %p199 = scmp.eq.s32.totalorder %s26, 0
      %p200 = por %p198, %p199
      %s202 = sadd.s32 %s201, 1
      %p205 = scmp.eq.s32.totalorder %s20, 1
      %p206 = scmp.ne.s32.totalorder %s201, %s203
      %p207 = scmp.eq.s32.totalorder %s20, 0
      %p208 = por %p206, %p207
      %p209 = scmp.ne.s32.totalorder %s201, %s203
      %p210 = scmp.eq.s32.totalorder %s25, 1
      %p211 = por %p209, %p210
      %p212 = scmp.ne.s32.totalorder %s203, %s204
      %p213 = scmp.eq.s32.totalorder %s25, 0
      %p214 = por %p212, %p213
      %p215 = scmp.ne.s32.totalorder %s203, %s204
      %p216 = scmp.eq.s32.totalorder %s26, 1
      %p217 = por %p215, %p216
      %p219 = scmp.ne.s32.totalorder %s204, %s218
      %p220 = scmp.eq.s32.totalorder %s26, 0
      %p221 = por %p219, %p220
      %s223 = sadd.s32 %s222, 1
      %p226 = scmp.eq.s32.totalorder %s20, 1
      %p227 = scmp.ne.s32.totalorder %s222, %s224
      %p228 = scmp.eq.s32.totalorder %s20, 0
      %p229 = por %p227, %p228
      %p230 = scmp.ne.s32.totalorder %s222, %s224
      %p231 = scmp.eq.s32.totalorder %s25, 1
      %p232 = por %p230, %p231
      %p233 = scmp.ne.s32.totalorder %s224, %s225
      %p234 = scmp.eq.s32.totalorder %s25, 0
      %p235 = por %p233, %p234
      %p236 = scmp.ne.s32.totalorder %s224, %s225
      %p237 = scmp.eq.s32.totalorder %s26, 1
      %p238 = por %p236, %p237
      %p240 = scmp.ne.s32.totalorder %s225, %s239
      %p241 = scmp.eq.s32.totalorder %s26, 0
      %p242 = por %p240, %p241
      %s244 = sadd.s32 %s243, 1
      %p247 = scmp.eq.s32.totalorder %s20, 1
      %p248 = scmp.ne.s32.totalorder %s243, %s245
      %p249 = scmp.eq.s32.totalorder %s20, 0
      %p250 = por %p248, %p249
      %p251 = scmp.ne.s32.totalorder %s243, %s245
      %p252 = scmp.eq.s32.totalorder %s25, 1
      %p253 = por %p251, %p252
      %p254 = scmp.ne.s32.totalorder %s245, %s246
      %p255 = scmp.eq.s32.totalorder %s25, 0
      %p256 = por %p254, %p255
      %p257 = scmp.ne.s32.totalorder %s245, %s246
      %p258 = scmp.eq.s32.totalorder %s26, 1
      %p259 = por %p257, %p258
      %p261 = scmp.ne.s32.totalorder %s246, %s260
      %p262 = scmp.eq.s32.totalorder %s26, 0
      %p263 = por %p261, %p262
      %s264 = ssub.s32 %s20, %s27
      %p265 = scmp.eq.s32.totalorder %s264, 0
      %s267 = sadd.s32 %s266, 1
      %s268 = scalar_select %p265, %s266, %s267
      %p271 = pneg %p265
      %p272 = scmp.eq.s32.totalorder %s20, 1
      %p273 = por %p271, %p272
      %p274 = scmp.ne.s32.totalorder %s266, %s269
      %p275 = scmp.eq.s32.totalorder %s20, 0
      %p276 = por %p274, %p275
      %p277 = scmp.ne.s32.totalorder %s266, %s269
      %p278 = scmp.eq.s32.totalorder %s25, 1
      %p279 = por %p277, %p278
      %p280 = scmp.ne.s32.totalorder %s269, %s270
      %p281 = scmp.eq.s32.totalorder %s25, 0
      %p282 = por %p280, %p281
      %p283 = scmp.ne.s32.totalorder %s269, %s270
      %p284 = scmp.eq.s32.totalorder %s26, 1
      %p285 = por %p283, %p284
      %p287 = scmp.ne.s32.totalorder %s270, %s286
      %p288 = scmp.eq.s32.totalorder %s26, 0
      %p289 = por %p287, %p288
      %p290 = scmp.le.s32.totalorder 1, %s20
      %p291 = scmp.lt.s32.totalorder %s20, 3
      %p292 = pnand %p290, %p291
      %p293 = pneg %p292
      // Predicated region
      $region9: #{convnet_forward.1} parent=5 // pred_check
        _
      $region10: #{convnet_forward.1} parent=5 // pred_check_branch
        %295 = sbr.rel (%p292) target = $region12
      $region11: #{convnet_forward.1} parent=5 // pred_region
        %s296 = ssub.s32 %s20, 1
        // Predicated region
        $region13: #{convnet_forward.1} parent=11 // pred_check
          %p297 = pneg %p67
        $region14: #{convnet_forward.1} parent=11 // pred_check_branch
          %299 = sbr.rel (%p297) target = $region16
        $region15: #{convnet_forward.1} parent=11 // pred_region
          _
        $region16: #{convnet_forward.1} parent=11 // pred_fallthru
          _
        // Predicated region
        $region17: #{convnet_forward.1} parent=11 // pred_check
          %p300 = pneg %p88
        $region18: #{convnet_forward.1} parent=11 // pred_check_branch
          %302 = sbr.rel (%p300) target = $region20
        $region19: #{convnet_forward.1} parent=11 // pred_region
          _
        $region20: #{convnet_forward.1} parent=11 // pred_fallthru
          _
        // Predicated region
        $region21: #{convnet_forward.1} parent=11 // pred_check
          %p303 = pneg %p109
        $region22: #{convnet_forward.1} parent=11 // pred_check_branch
          %305 = sbr.rel (%p303) target = $region24
        $region23: #{convnet_forward.1} parent=11 // pred_region
          _
        $region24: #{convnet_forward.1} parent=11 // pred_fallthru
          _
        // Predicated region
        $region25: #{convnet_forward.1} parent=11 // pred_check
          %p306 = pneg %p130
        $region26: #{convnet_forward.1} parent=11 // pred_check_branch
          %308 = sbr.rel (%p306) target = $region28
        $region27: #{convnet_forward.1} parent=11 // pred_region
          _
        $region28: #{convnet_forward.1} parent=11 // pred_fallthru
          _
        // Predicated region
        $region29: #{convnet_forward.1} parent=11 // pred_check
          %p309 = pneg %p151
        $region30: #{convnet_forward.1} parent=11 // pred_check_branch
          %311 = sbr.rel (%p309) target = $region32
        $region31: #{convnet_forward.1} parent=11 // pred_region
          _
        $region32: #{convnet_forward.1} parent=11 // pred_fallthru
          _
        // Predicated region
        $region33: #{convnet_forward.1} parent=11 // pred_check
          %p312 = pneg %p172
        $region34: #{convnet_forward.1} parent=11 // pred_check_branch
          %314 = sbr.rel (%p312) target = $region36
        $region35: #{convnet_forward.1} parent=11 // pred_region
          _
        $region36: #{convnet_forward.1} parent=11 // pred_fallthru
          _
        // Predicated region
        $region37: #{convnet_forward.1} parent=11 // pred_check
          %p315 = pneg %p193
        $region38: #{convnet_forward.1} parent=11 // pred_check_branch
          %317 = sbr.rel (%p315) target = $region40
        $region39: #{convnet_forward.1} parent=11 // pred_region
          _
        $region40: #{convnet_forward.1} parent=11 // pred_fallthru
          _
        // Predicated region
        $region41: #{convnet_forward.1} parent=11 // pred_check
          %p318 = pneg %p214
        $region42: #{convnet_forward.1} parent=11 // pred_check_branch
          %320 = sbr.rel (%p318) target = $region44
        $region43: #{convnet_forward.1} parent=11 // pred_region
          _
        $region44: #{convnet_forward.1} parent=11 // pred_fallthru
          _
        // Predicated region
        $region45: #{convnet_forward.1} parent=11 // pred_check
          %p321 = pneg %p235
        $region46: #{convnet_forward.1} parent=11 // pred_check_branch
          %323 = sbr.rel (%p321) target = $region48
        $region47: #{convnet_forward.1} parent=11 // pred_region
          _
        $region48: #{convnet_forward.1} parent=11 // pred_fallthru
          _
        // Predicated region
        $region49: #{convnet_forward.1} parent=11 // pred_check
          %p324 = pneg %p256
        $region50: #{convnet_forward.1} parent=11 // pred_check_branch
          %326 = sbr.rel (%p324) target = $region52
        $region51: #{convnet_forward.1} parent=11 // pred_region
          _
        $region52: #{convnet_forward.1} parent=11 // pred_fallthru
          _
      $region12: #{convnet_forward.1} parent=5 // pred_fallthru
        _
      %p327 = scmp.lt.s32.totalorder %s20, 2
      // Predicated region
      $region53: #{convnet_forward.1} parent=5 // pred_check
        %p328 = pneg %p327
      $region54: #{convnet_forward.1} parent=5 // pred_check_branch
        %330 = sbr.rel (%p328) target = $region56
      $region55: #{convnet_forward.1} parent=5 // pred_region
        // Predicated region
        $region57: #{convnet_forward.1} parent=55 // pred_check
          %p331 = pneg %p40
        $region58: #{convnet_forward.1} parent=55 // pred_check_branch
          %333 = sbr.rel (%p331) target = $region60
        $region59: #{convnet_forward.1} parent=55 // pred_region
          %p334 = scmp.lt.s32.totalorder %s20, 1
          %s335 = scalar_select %p334, %s20, 1
          %s336 = smul.addr %s335, 2
          %s337 = smul.addr %s336, 8
          %s338 = scalar_lea.vmem %s0, %s337
        $region60: #{convnet_forward.1} parent=55 // pred_fallthru
          _
      $region56: #{convnet_forward.1} parent=5 // pred_fallthru
        _
      %p339 = scmp.le.s32.totalorder 1, %s20
      %p340 = scmp.lt.s32.totalorder %s20, 3
      %p341 = pnand %p339, %p340
      %p342 = pneg %p341
      // Predicated region
      $region61: #{convnet_forward.1} parent=5 // pred_check
        _
      $region62: #{convnet_forward.1} parent=5 // pred_check_branch
        %344 = sbr.rel (%p341) target = $region64
      $region63: #{convnet_forward.1} parent=5 // pred_region
        %s345 = ssub.s32 %s20, 1
        %p346 = scmp.lt.s32.totalorder %s25, 1
        %s347 = scalar_select %p346, %s25, 1
        %s348 = smul.addr %s347, 2
        %s349 = smul.addr %s348, 8
        %s350 = scalar_lea.vmem %s0, %s349
        %p351 = pneg %p46
        %p352 = pneg %p43
        %p353 = pneg %p67
        %p354 = pneg %p64
        %p355 = pneg %p88
        %p356 = pneg %p85
        %p357 = pneg %p109
        %p358 = pneg %p106
        %p359 = pneg %p130
        %p360 = pneg %p127
        %p361 = pneg %p151
        %p362 = pneg %p148
        %p363 = pneg %p172
        %p364 = pneg %p169
        %p365 = pneg %p193
        %p366 = pneg %p190
        %p367 = pneg %p214
        %p368 = pneg %p211
        %p369 = pneg %p235
        %p370 = pneg %p232
        %p371 = pneg %p256
        %p372 = pneg %p253
        %p373 = pneg %p282
        %p374 = pneg %p279
        %s375 = sand.u32 %s269, 1
        %s376 = scalar_lea.sflag [#allocation3], %s375
        %s377 = sand.u32 %s269, 1
        %s378 = smul.addr %s377, 32
        %s379 = scalar_lea.vmem [#allocation2], %s378
        %p380 = scmp.lt.s32.totalorder %s25, 1
        %s381 = scalar_select %p380, %s25, 1
        %s382 = smul.addr %s381, 2
        %s383 = smul.addr %s382, 8
        %s384 = scalar_lea.vmem %s0, %s383
        %v386 = vld [vmem:[%s384] sm:$0xff]
        %v387 = vld [vmem:[%s384 + $0x8] sm:$0xff]
        %v388 = vpack.c.bf16 %v387, %v386
        %v390 = vshrl.u32 %v388, 16
        %v392 = vrot.slane %v390, 7
        %v393 = vshll.u32 %v388, 16
        %v395 = vor.u32 %v392, %v393
        %vm397 = vcmask 1040384
        %vm398 = vsmask.f32 256
        %vm399 = vmand %vm397, %vm398
        %v400 = vsel %vm399, 0, %v395
        %v401 = vrot.slane %v393, 1
        %v402 = vor.u32 %v390, %v401
        %vm404 = vcmask 1047552
        %vm405 = vsmask.f32 7424
        %vm406 = vmand %vm404, %vm405
        %v407 = vsel %vm406, %v402, 0
        %409 = vrot.lane.b32.xlu0 %v388, 4
        %v410 = vpop.permute.xlu0 %409
        %412 = vrot.lane.b32.xlu0 %v407, 8
        %v413 = vpop.permute.xlu0 %412
        %vm414 = vcmask 31744
        %v417 = vsel %vm414, %v400, %v410
        %vm418 = vcmask 64512
        %v420 = vsel %vm418, %v417, %v413
        %v421 = vld [vmem:[%s1] sm:$0xf]
        %v422 = vld [vmem:[%s1 + $0x4] sm:$0x3]
        %v423 = vld [vmem:[%s2] sm:$0x1]
        %v425 = vlaneseq
        %v426 = vshrl.u32 %v425, 7
        %v427 = vsub.s32 0, %v426
        %v428 = vrot.slane %v423, %v427
        %v432 = vunpack.c.l.b16 %v421
        %v433 = vunpack.c.l.b16 %v422
        %v434 = vpack.c.b16 %v433, %v432
        %vm435 = vcmask 97280
        %v436 = vsel %vm435, %v420, 0
        %vm438 = vcmask 1045504
        %v440 = vsel %vm438, %v434, 0
        %442 = vmatprep.subr.bf16.mxu0 0
        %443 = vmatpush1.bf16.msra.mxu0 0
        %444 = vmatprep.subr.bf16.mxu0 0
        %445 = vmatpush1.bf16.msra.mxu0 0
        %446 = vmatprep.subr.bf16.mxu0 0
        %447 = vmatpush1.bf16.msra.mxu0 0
        %448 = vmatprep.subr.bf16.mxu0 0
        %449 = vmatpush1.bf16.msra.mxu0 0
        %450 = vmatprep.subr.bf16.mxu0 0
        %451 = vmatpush1.bf16.msra.mxu0 0
        %452 = vmatprep.subr.bf16.mxu0 0
        %453 = vmatpush1.bf16.msra.mxu0 0
        %454 = vmatprep.subr.bf16.mxu0 0
        %455 = vmatpush1.bf16.msra.mxu0 0
        %456 = vmatprep.subr.bf16.mxu0 0
        %457 = vmatpush1.bf16.msra.mxu0 %v440
        %458 = vmatprep.subr.bf16.mxu0 0
        %459 = vmatpush2.bf16.msra.mxu0 0
        %460 = vmatprep.subr.bf16.mxu0 0
        %461 = vmatpush2.bf16.msra.mxu0 0
        %462 = vmatprep.subr.bf16.mxu0 0
        %463 = vmatpush2.bf16.msra.mxu0 0
        %464 = vmatprep.subr.bf16.mxu0 0
        %465 = vmatpush2.bf16.msra.mxu0 0
        %466 = vmatprep.subr.bf16.mxu0 0
        %467 = vmatpush2.bf16.msra.mxu0 0
        %468 = vmatprep.subr.bf16.mxu0 0
        %469 = vmatpush2.bf16.msra.mxu0 0
        %470 = vmatprep.subr.bf16.mxu0 0
        %471 = vmatpush2.bf16.msra.mxu0 0
        %472 = vmatprep.subr.bf16.mxu0 0
        %473 = vmatpush2.bf16.msra.mxu0 0
        %474 = vmatprep.mubr.bf16.mxu0 0
        %475 = vmatmul.mubr.bf16.gmra.mxu0 %v436
        %v476 = vpop.f32.mrf.mxu0
        %v477 = vadd.f32 %v428, %v476
        %v478 = vpop.f32.mrf.mxu0
        %v479 = vpop.f32.mrf.mxu0
        %v480 = vadd.f32 %v428, %v479
        %v481 = vpop.f32.mrf.mxu0
        %482 = vdwg.mxu0
        %v483 = vmax.f32 %v477, 0.0
        %v484 = vmax.f32 %v480, 0.0
        %v485 = vpack.c.bf16 %v484, %v483
        %v487 = vshrl.u32 %v485, 16
        %v489 = vrot.slane %v487, 7
        %v490 = vshll.u32 %v485, 16
        %v492 = vor.u32 %v489, %v490
        %v494 = vsel %vm399, 0, %v492
        %v495 = vrot.slane %v490, 1
        %v496 = vor.u32 %v487, %v495
        %v498 = vsel %vm406, %v496, 0
        %500 = vrot.lane.b32.xlu0 %v485, 64
        %v501 = vpop.permute.xlu0 %500
        %vm502 = vcmask 523264
        %v505 = vsel %vm502, %v494, %v501
        %v507 = vld [vmem:[%s3] sm:$0xf]
        %v508 = vld [vmem:[%s3 + $0x4] sm:$0xf]
        %v509 = vld [vmem:[%s3 + $0x8] sm:$0xf]
        %v510 = vld [vmem:[%s3 + $0xc] sm:$0xf]
        %v511 = vld [vmem:[%s3 + $0x10] sm:$0xf]
        %v512 = vld [vmem:[%s3 + $0x14] sm:$0xf]
        %v513 = vld [vmem:[%s3 + $0x18] sm:$0xf]
        %v514 = vld [vmem:[%s3 + $0x1c] sm:$0xf]
        %v515 = vld [vmem:[%s3 + $0x20] sm:$0xf]
        %v516 = vld [vmem:[%s3 + $0x24] sm:$0xf]
        %v517 = vld [vmem:[%s3 + $0x28] sm:$0xf]
        %v518 = vld [vmem:[%s3 + $0x2c] sm:$0xf]
        %v519 = vld [vmem:[%s3 + $0x30] sm:$0xf]
        %v520 = vld [vmem:[%s3 + $0x34] sm:$0xf]
        %v521 = vld [vmem:[%s3 + $0x38] sm:$0xf]
        %v522 = vld [vmem:[%s3 + $0x3c] sm:$0xf]
        %v523 = vld [vmem:[%s3 + $0x40] sm:$0xf]
        %v524 = vld [vmem:[%s3 + $0x44] sm:$0xf]
        %v525 = vld [vmem:[%s3 + $0x48] sm:$0xf]
        %v526 = vld [vmem:[%s3 + $0x4c] sm:$0xf]
        %v527 = vld [vmem:[%s3 + $0x50] sm:$0xf]
        %v528 = vld [vmem:[%s3 + $0x54] sm:$0xf]
        %v529 = vld [vmem:[%s3 + $0x58] sm:$0xf]
        %v530 = vld [vmem:[%s3 + $0x5c] sm:$0xf]
        %v531 = vld [vmem:[%s4] sm:$0x1]
        %v533 = vlaneseq
        %v534 = vshrl.u32 %v533, 7
        %v535 = vsub.s32 0, %v534
        %v536 = vrot.slane %v531, %v535
        %v562 = vunpack.c.l.b16 %v507
        %v563 = vunpack.c.l.b16 %v508
        %v564 = vunpack.c.l.b16 %v509
        %v565 = vunpack.c.l.b16 %v510
        %v566 = vunpack.c.l.b16 %v511
        %v567 = vunpack.c.l.b16 %v512
        %v568 = vunpack.c.l.b16 %v513
        %v569 = vunpack.c.l.b16 %v514
        %v570 = vunpack.c.l.b16 %v515
        %v571 = vunpack.c.l.b16 %v516
        %v572 = vunpack.c.l.b16 %v517
        %v573 = vunpack.c.l.b16 %v518
        %v574 = vunpack.c.l.b16 %v519
        %v575 = vunpack.c.l.b16 %v520
        %v576 = vunpack.c.l.b16 %v521
        %v577 = vunpack.c.l.b16 %v522
        %v578 = vunpack.c.l.b16 %v523
        %v579 = vunpack.c.l.b16 %v524
        %v580 = vunpack.c.l.b16 %v525
        %v581 = vunpack.c.l.b16 %v526
        %v582 = vunpack.c.l.b16 %v527
        %v583 = vunpack.c.l.b16 %v528
        %v584 = vunpack.c.l.b16 %v529
        %v585 = vunpack.c.l.b16 %v530
        %v586 = vpack.c.b16 %v563, %v562
        %v587 = vpack.c.b16 %v565, %v564
        %v588 = vpack.c.b16 %v567, %v566
        %v589 = vpack.c.b16 %v569, %v568
        %v590 = vpack.c.b16 %v571, %v570
        %v591 = vpack.c.b16 %v573, %v572
        %v592 = vpack.c.b16 %v575, %v574
        %v593 = vpack.c.b16 %v577, %v576
        %v594 = vpack.c.b16 %v579, %v578
        %v595 = vpack.c.b16 %v581, %v580
        %v596 = vpack.c.b16 %v583, %v582
        %v597 = vpack.c.b16 %v585, %v584
        %v611 = vsel %vm502, %v498, 0
        %613 = vmatprep.subr.bf16.mxu0 0
        %614 = vmatpush1.bf16.msra.mxu0 %v593
        %615 = vmatprep.subr.bf16.mxu0 0
        %616 = vmatpush1.bf16.msra.mxu0 %v592
        %617 = vmatprep.subr.bf16.mxu0 0
        %618 = vmatpush1.bf16.msra.mxu0 %v591
        %619 = vmatprep.subr.bf16.mxu0 0
        %620 = vmatpush1.bf16.msra.mxu0 %v590
        %621 = vmatprep.subr.bf16.mxu0 0
        %622 = vmatpush1.bf16.msra.mxu0 %v589
        %623 = vmatprep.subr.bf16.mxu0 0
        %624 = vmatpush1.bf16.msra.mxu0 %v588
        %625 = vmatprep.subr.bf16.mxu0 0
        %626 = vmatpush1.bf16.msra.mxu0 %v587
        %627 = vmatprep.subr.bf16.mxu0 0
        %628 = vmatpush1.bf16.msra.mxu0 %v586
        %629 = vmatprep.subr.bf16.mxu0 0
        %630 = vmatpush2.bf16.msra.mxu0 0
        %631 = vmatprep.subr.bf16.mxu0 0
        %632 = vmatpush2.bf16.msra.mxu0 0
        %633 = vmatprep.subr.bf16.mxu0 0
        %634 = vmatpush2.bf16.msra.mxu0 0
        %635 = vmatprep.subr.bf16.mxu0 0
        %636 = vmatpush2.bf16.msra.mxu0 0
        %637 = vmatprep.subr.bf16.mxu0 0
        %638 = vmatpush2.bf16.msra.mxu0 %v597
        %639 = vmatprep.subr.bf16.mxu0 0
        %640 = vmatpush2.bf16.msra.mxu0 %v596
        %641 = vmatprep.subr.bf16.mxu0 0
        %642 = vmatpush2.bf16.msra.mxu0 %v595
        %643 = vmatprep.subr.bf16.mxu0 0
        %644 = vmatpush2.bf16.msra.mxu0 %v594
        %645 = vmatprep.mubr.bf16.mxu0 %v611
        %646 = vmatmul.mubr.bf16.gmra.mxu0 %v505
        %v647 = vpop.f32.mrf.mxu0
        %v648 = vadd.f32 %v536, %v647
        %v649 = vpop.f32.mrf.mxu0
        %v650 = vpop.f32.mrf.mxu0
        %v651 = vadd.f32 %v536, %v650
        %v652 = vpop.f32.mrf.mxu0
        %653 = vdwg.mxu0
        %v654 = vmax.f32 %v648, 0.0
        %v655 = vmax.f32 %v651, 0.0
        %v656 = vpack.c.bf16 %v655, %v654
        %v658 = vshrl.u32 %v656, 16
        %v660 = vrot.slane %v658, 7
        %v661 = vshll.u32 %v656, 16
        %v663 = vor.u32 %v660, %v661
        %v665 = vsel %vm399, 0, %v663
        %v666 = vrot.slane %v661, 1
        %v667 = vor.u32 %v658, %v666
        %v669 = vsel %vm406, %v667, 0
        %v670 = vld [vmem:[%s5] sm:$0xff]
        %v671 = vld [vmem:[%s5 + $0x8] sm:$0xff]
        %v672 = vld [vmem:[%s5 + $0x10] sm:$0xff]
        %v673 = vld [vmem:[%s5 + $0x18] sm:$0xff]
        %v674 = vld [vmem:[%s5 + $0x20] sm:$0xff]
        %v675 = vld [vmem:[%s5 + $0x28] sm:$0xff]
        %v676 = vld [vmem:[%s5 + $0x30] sm:$0xff]
        %v677 = vld [vmem:[%s5 + $0x38] sm:$0xff]
        %v678 = vld [vmem:[%s5 + $0x40] sm:$0xff]
        %v679 = vld [vmem:[%s5 + $0x48] sm:$0xff]
        %v680 = vld [vmem:[%s5 + $0x50] sm:$0xff]
        %v681 = vld [vmem:[%s5 + $0x58] sm:$0xff]
        %v682 = vld [vmem:[%s5 + $0x60] sm:$0xff]
        %v683 = vld [vmem:[%s5 + $0x68] sm:$0xff]
        %v684 = vld [vmem:[%s5 + $0x70] sm:$0xff]
        %v685 = vld [vmem:[%s5 + $0x78] sm:$0xff]
        %v686 = vld [vmem:[%s5 + $0x80] sm:$0xff]
        %v687 = vld [vmem:[%s5 + $0x88] sm:$0xff]
        %v688 = vld [vmem:[%s5 + $0x90] sm:$0xff]
        %v689 = vld [vmem:[%s5 + $0x98] sm:$0xff]
        %v690 = vld [vmem:[%s5 + $0xa0] sm:$0xff]
        %v691 = vld [vmem:[%s5 + $0xa8] sm:$0xff]
        %v692 = vld [vmem:[%s5 + $0xb0] sm:$0xff]
        %v693 = vld [vmem:[%s5 + $0xb8] sm:$0xff]
        %v694 = vld [vmem:[%s5 + $0xc0] sm:$0xff]
        %v695 = vld [vmem:[%s5 + $0xc8] sm:$0xff]
        %v696 = vld [vmem:[%s5 + $0xd0] sm:$0xff]
        %v697 = vld [vmem:[%s5 + $0xd8] sm:$0xff]
        %v698 = vld [vmem:[%s5 + $0xe0] sm:$0xff]
        %v699 = vld [vmem:[%s5 + $0xe8] sm:$0xff]
        %v700 = vld [vmem:[%s5 + $0xf0] sm:$0xff]
        %v701 = vld [vmem:[%s5 + $0xf8] sm:$0xff]
        %v702 = vld [vmem:[%s5 + $0x100] sm:$0xff]
        %v703 = vld [vmem:[%s5 + $0x108] sm:$0xff]
        %v704 = vld [vmem:[%s5 + $0x110] sm:$0xff]
        %v705 = vld [vmem:[%s5 + $0x118] sm:$0xff]
        %v706 = vld [vmem:[%s5 + $0x120] sm:$0xff]
        %v707 = vld [vmem:[%s5 + $0x128] sm:$0xff]
        %v708 = vld [vmem:[%s5 + $0x130] sm:$0xff]
        %v709 = vld [vmem:[%s5 + $0x138] sm:$0xff]
        %v710 = vld [vmem:[%s5 + $0x140] sm:$0xff]
        %v711 = vld [vmem:[%s5 + $0x148] sm:$0xff]
        %v712 = vld [vmem:[%s5 + $0x150] sm:$0xff]
        %v713 = vld [vmem:[%s5 + $0x158] sm:$0xff]
        %v714 = vld [vmem:[%s5 + $0x160] sm:$0xff]
        %v715 = vld [vmem:[%s5 + $0x168] sm:$0xff]
        %v716 = vld [vmem:[%s5 + $0x170] sm:$0xff]
        %v717 = vld [vmem:[%s5 + $0x178] sm:$0xff]
        %v718 = vld [vmem:[%s6] sm:$0x3]
        %v720 = vlaneseq
        %v721 = vshrl.u32 %v720, 7
        %v722 = vsub.s32 0, %v721
        %v723 = vrot.slane %v718, %v722
        %v724 = vlaneseq
        %v725 = vshrl.u32 %v724, 7
        %v726 = vsub.s32 1, %v725
        %v727 = vrot.slane %v718, %v726
        %v778 = vunpack.c.l.b16 %v670
        %v779 = vunpack.c.h.b16 %v670
        %v780 = vunpack.c.l.b16 %v671
        %v781 = vunpack.c.h.b16 %v671
        %v782 = vunpack.c.l.b16 %v672
        %v783 = vunpack.c.h.b16 %v672
        %v784 = vunpack.c.l.b16 %v673
        %v785 = vunpack.c.h.b16 %v673
        %v786 = vunpack.c.l.b16 %v674
        %v787 = vunpack.c.h.b16 %v674
        %v788 = vunpack.c.l.b16 %v675
        %v789 = vunpack.c.h.b16 %v675
        %v790 = vunpack.c.l.b16 %v676
        %v791 = vunpack.c.h.b16 %v676
        %v792 = vunpack.c.l.b16 %v677
        %v793 = vunpack.c.h.b16 %v677
        %v794 = vunpack.c.l.b16 %v678
        %v795 = vunpack.c.h.b16 %v678
        %v796 = vunpack.c.l.b16 %v679
        %v797 = vunpack.c.h.b16 %v679
        %v798 = vunpack.c.l.b16 %v680
        %v799 = vunpack.c.h.b16 %v680
        %v800 = vunpack.c.l.b16 %v681
        %v801 = vunpack.c.h.b16 %v681
        %v802 = vunpack.c.l.b16 %v682
        %v803 = vunpack.c.h.b16 %v682
        %v804 = vunpack.c.l.b16 %v683
        %v805 = vunpack.c.h.b16 %v683
        %v806 = vunpack.c.l.b16 %v684
        %v807 = vunpack.c.h.b16 %v684
        %v808 = vunpack.c.l.b16 %v685
        %v809 = vunpack.c.h.b16 %v685
        %v810 = vunpack.c.l.b16 %v686
        %v811 = vunpack.c.h.b16 %v686
        %v812 = vunpack.c.l.b16 %v687
        %v813 = vunpack.c.h.b16 %v687
        %v814 = vunpack.c.l.b16 %v688
        %v815 = vunpack.c.h.b16 %v688
        %v816 = vunpack.c.l.b16 %v689
        %v817 = vunpack.c.h.b16 %v689
        %v818 = vunpack.c.l.b16 %v690
        %v819 = vunpack.c.h.b16 %v690
        %v820 = vunpack.c.l.b16 %v691
        %v821 = vunpack.c.h.b16 %v691
        %v822 = vunpack.c.l.b16 %v692
        %v823 = vunpack.c.h.b16 %v692
        %v824 = vunpack.c.l.b16 %v693
        %v825 = vunpack.c.h.b16 %v693
        %v826 = vunpack.c.l.b16 %v694
        %v827 = vunpack.c.h.b16 %v694
        %v828 = vunpack.c.l.b16 %v695
        %v829 = vunpack.c.h.b16 %v695
        %v830 = vunpack.c.l.b16 %v696
        %v831 = vunpack.c.h.b16 %v696
        %v832 = vunpack.c.l.b16 %v697
        %v833 = vunpack.c.h.b16 %v697
        %v834 = vunpack.c.l.b16 %v698
        %v835 = vunpack.c.h.b16 %v698
        %v836 = vunpack.c.l.b16 %v699
        %v837 = vunpack.c.h.b16 %v699
        %v838 = vunpack.c.l.b16 %v700
        %v839 = vunpack.c.h.b16 %v700
        %v840 = vunpack.c.l.b16 %v701
        %v841 = vunpack.c.h.b16 %v701
        %v842 = vunpack.c.l.b16 %v702
        %v843 = vunpack.c.h.b16 %v702
        %v844 = vunpack.c.l.b16 %v703
        %v845 = vunpack.c.h.b16 %v703
        %v846 = vunpack.c.l.b16 %v704
        %v847 = vunpack.c.h.b16 %v704
        %v848 = vunpack.c.l.b16 %v705
        %v849 = vunpack.c.h.b16 %v705
        %v850 = vunpack.c.l.b16 %v706
        %v851 = vunpack.c.h.b16 %v706
        %v852 = vunpack.c.l.b16 %v707
        %v853 = vunpack.c.h.b16 %v707
        %v854 = vunpack.c.l.b16 %v708
        %v855 = vunpack.c.h.b16 %v708
        %v856 = vunpack.c.l.b16 %v709
        %v857 = vunpack.c.h.b16 %v709
        %v858 = vunpack.c.l.b16 %v710
        %v859 = vunpack.c.h.b16 %v710
        %v860 = vunpack.c.l.b16 %v711
        %v861 = vunpack.c.h.b16 %v711
        %v862 = vunpack.c.l.b16 %v712
        %v863 = vunpack.c.h.b16 %v712
        %v864 = vunpack.c.l.b16 %v713
        %v865 = vunpack.c.h.b16 %v713
        %v866 = vunpack.c.l.b16 %v714
        %v867 = vunpack.c.h.b16 %v714
        %v868 = vunpack.c.l.b16 %v715
        %v869 = vunpack.c.h.b16 %v715
        %v870 = vunpack.c.l.b16 %v716
        %v871 = vunpack.c.h.b16 %v716
        %v872 = vunpack.c.l.b16 %v717
        %v873 = vunpack.c.h.b16 %v717
        %v874 = vpack.c.b16 %v780, %v778
        %v875 = vpack.c.b16 %v781, %v779
        %v876 = vpack.c.b16 %v784, %v782
        %v877 = vpack.c.b16 %v785, %v783
        %v878 = vpack.c.b16 %v788, %v786
        %v879 = vpack.c.b16 %v789, %v787
        %v880 = vpack.c.b16 %v792, %v790
        %v881 = vpack.c.b16 %v793, %v791
        %v882 = vpack.c.b16 %v796, %v794
        %v883 = vpack.c.b16 %v797, %v795
        %v884 = vpack.c.b16 %v800, %v798
        %v885 = vpack.c.b16 %v801, %v799
        %v886 = vpack.c.b16 %v804, %v802
        %v887 = vpack.c.b16 %v805, %v803
        %v888 = vpack.c.b16 %v808, %v806
        %v889 = vpack.c.b16 %v809, %v807
        %v890 = vpack.c.b16 %v812, %v810
        %v891 = vpack.c.b16 %v813, %v811
        %v892 = vpack.c.b16 %v816, %v814
        %v893 = vpack.c.b16 %v817, %v815
        %v894 = vpack.c.b16 %v820, %v818
        %v895 = vpack.c.b16 %v821, %v819
        %v896 = vpack.c.b16 %v824, %v822
        %v897 = vpack.c.b16 %v825, %v823
        %v898 = vpack.c.b16 %v828, %v826
        %v899 = vpack.c.b16 %v829, %v827
        %v900 = vpack.c.b16 %v832, %v830
        %v901 = vpack.c.b16 %v833, %v831
        %v902 = vpack.c.b16 %v836, %v834
        %v903 = vpack.c.b16 %v837, %v835
        %v904 = vpack.c.b16 %v840, %v838
        %v905 = vpack.c.b16 %v841, %v839
        %v906 = vpack.c.b16 %v844, %v842
        %v907 = vpack.c.b16 %v845, %v843
        %v908 = vpack.c.b16 %v848, %v846
        %v909 = vpack.c.b16 %v849, %v847
        %v910 = vpack.c.b16 %v852, %v850
        %v911 = vpack.c.b16 %v853, %v851
        %v912 = vpack.c.b16 %v856, %v854
        %v913 = vpack.c.b16 %v857, %v855
        %v914 = vpack.c.b16 %v860, %v858
        %v915 = vpack.c.b16 %v861, %v859
        %v916 = vpack.c.b16 %v864, %v862
        %v917 = vpack.c.b16 %v865, %v863
        %v918 = vpack.c.b16 %v868, %v866
        %v919 = vpack.c.b16 %v869, %v867
        %v920 = vpack.c.b16 %v872, %v870
        %v921 = vpack.c.b16 %v873, %v871
        %970 = vmatprep.subr.bf16.mxu0 %v889
        %971 = vmatpush1.bf16.msra.mxu0 %v888
        %972 = vmatprep.subr.bf16.mxu0 %v887
        %973 = vmatpush1.bf16.msra.mxu0 %v886
        %974 = vmatprep.subr.bf16.mxu0 %v885
        %975 = vmatpush1.bf16.msra.mxu0 %v884
        %976 = vmatprep.subr.bf16.mxu0 %v883
        %977 = vmatpush1.bf16.msra.mxu0 %v882
        %978 = vmatprep.subr.bf16.mxu0 %v881
        %979 = vmatpush1.bf16.msra.mxu0 %v880
        %980 = vmatprep.subr.bf16.mxu0 %v879
        %981 = vmatpush1.bf16.msra.mxu0 %v878
        %982 = vmatprep.subr.bf16.mxu0 %v877
        %983 = vmatpush1.bf16.msra.mxu0 %v876
        %984 = vmatprep.subr.bf16.mxu0 %v875
        %985 = vmatpush1.bf16.msra.mxu0 %v874
        %986 = vmatprep.subr.bf16.mxu0 %v905
        %987 = vmatpush2.bf16.msra.mxu0 %v904
        %988 = vmatprep.subr.bf16.mxu0 %v903
        %989 = vmatpush2.bf16.msra.mxu0 %v902
        %990 = vmatprep.subr.bf16.mxu0 %v901
        %991 = vmatpush2.bf16.msra.mxu0 %v900
        %992 = vmatprep.subr.bf16.mxu0 %v899
        %993 = vmatpush2.bf16.msra.mxu0 %v898
        %994 = vmatprep.subr.bf16.mxu0 %v897
        %995 = vmatpush2.bf16.msra.mxu0 %v896
        %996 = vmatprep.subr.bf16.mxu0 %v895
        %997 = vmatpush2.bf16.msra.mxu0 %v894
        %998 = vmatprep.subr.bf16.mxu0 %v893
        %999 = vmatpush2.bf16.msra.mxu0 %v892
        %1000 = vmatprep.subr.bf16.mxu0 %v891
        %1001 = vmatpush2.bf16.msra.mxu0 %v890
        %1002 = vmatprep.mubr.bf16.mxu0 %v656
        %1003 = vmatmul.mubr.bf16.gmra.mxu0 %v665
        %v1004 = vpop.f32.mrf.mxu0
        %v1005 = vadd.f32 %v723, %v1004
        %v1006 = vpop.f32.mrf.mxu0
        %v1007 = vadd.f32 %v727, %v1006
        %v1008 = vpop.f32.mrf.mxu0
        %v1009 = vadd.f32 %v723, %v1008
        %v1010 = vpop.f32.mrf.mxu0
        %v1011 = vadd.f32 %v727, %v1010
        %1012 = vdwg.mxu0
        %1013 = vmatprep.subr.bf16.mxu0 %v921
        %1014 = vmatpush1.bf16.msra.mxu0 %v920
        %1015 = vmatprep.subr.bf16.mxu0 %v919
        %1016 = vmatpush1.bf16.msra.mxu0 %v918
        %1017 = vmatprep.subr.bf16.mxu0 %v917
        %1018 = vmatpush1.bf16.msra.mxu0 %v916
        %1019 = vmatprep.subr.bf16.mxu0 %v915
        %1020 = vmatpush1.bf16.msra.mxu0 %v914
        %1021 = vmatprep.subr.bf16.mxu0 %v913
        %1022 = vmatpush1.bf16.msra.mxu0 %v912
        %1023 = vmatprep.subr.bf16.mxu0 %v911
        %1024 = vmatpush1.bf16.msra.mxu0 %v910
        %1025 = vmatprep.subr.bf16.mxu0 %v909
        %1026 = vmatpush1.bf16.msra.mxu0 %v908
        %1027 = vmatprep.subr.bf16.mxu0 %v907
        %1028 = vmatpush1.bf16.msra.mxu0 %v906
        %1029 = vmatprep.subr.bf16.mxu0 0
        %1030 = vmatpush2.bf16.msra.mxu0 0
        %1031 = vmatprep.subr.bf16.mxu0 0
        %1032 = vmatpush2.bf16.msra.mxu0 0
        %1033 = vmatprep.subr.bf16.mxu0 0
        %1034 = vmatpush2.bf16.msra.mxu0 0
        %1035 = vmatprep.subr.bf16.mxu0 0
        %1036 = vmatpush2.bf16.msra.mxu0 0
        %1037 = vmatprep.subr.bf16.mxu0 0
        %1038 = vmatpush2.bf16.msra.mxu0 0
        %1039 = vmatprep.subr.bf16.mxu0 0
        %1040 = vmatpush2.bf16.msra.mxu0 0
        %1041 = vmatprep.subr.bf16.mxu0 0
        %1042 = vmatpush2.bf16.msra.mxu0 0
        %1043 = vmatprep.subr.bf16.mxu0 0
        %1044 = vmatpush2.bf16.msra.mxu0 0
        %1045 = vmatprep.mubr.bf16.mxu0 0
        %1046 = vmatmul.mubr.bf16.gmra.mxu0 %v669
        %v1047 = vpop.f32.mrf.mxu0
        %v1048 = vadd.f32 %v1005, %v1047
        %v1049 = vpop.f32.mrf.mxu0
        %v1050 = vadd.f32 %v1007, %v1049
        %v1051 = vpop.f32.mrf.mxu0
        %v1052 = vadd.f32 %v1009, %v1051
        %v1053 = vpop.f32.mrf.mxu0
        %v1054 = vadd.f32 %v1011, %v1053
        %1055 = vdwg.mxu0
        %v1056 = vmax.f32 %v1048, 0.0
        %v1057 = vmax.f32 %v1050, 0.0
        %v1058 = vmax.f32 %v1052, 0.0
        %v1059 = vmax.f32 %v1054, 0.0
        %v1060 = vpack.c.bf16 %v1058, %v1056
        %v1061 = vpack.c.bf16 %v1059, %v1057
        %v1063 = vshrl.u32 %v1060, 16
        %v1065 = vrot.slane %v1063, 7
        %v1066 = vshll.u32 %v1060, 16
        %v1068 = vor.u32 %v1065, %v1066
        %v1070 = vshrl.u32 %v1061, 16
        %v1072 = vrot.slane %v1070, 7
        %v1073 = vshll.u32 %v1061, 16
        %v1075 = vor.u32 %v1072, %v1073
        %v1078 = vsel %vm399, 0, %v1068
        %v1079 = vsel %vm399, 0, %v1075
        %v1080 = vrot.slane %v1066, 1
        %v1081 = vor.u32 %v1063, %v1080
        %v1082 = vrot.slane %v1073, 1
        %v1083 = vor.u32 %v1070, %v1082
        %v1086 = vsel %vm406, %v1081, 0
        %v1087 = vsel %vm406, %v1083, 0
        %v1088 = vld [vmem:[%s7] sm:$0xff]
        %v1089 = vld [vmem:[%s7 + $0x8] sm:$0xff]
        %v1090 = vld [vmem:[%s7 + $0x10] sm:$0xff]
        %v1091 = vld [vmem:[%s7 + $0x18] sm:$0xff]
        %v1092 = vld [vmem:[%s7 + $0x20] sm:$0xff]
        %v1093 = vld [vmem:[%s7 + $0x28] sm:$0xff]
        %v1094 = vld [vmem:[%s7 + $0x30] sm:$0xff]
        %v1095 = vld [vmem:[%s7 + $0x38] sm:$0xff]
        %v1096 = vld [vmem:[%s7 + $0x40] sm:$0xff]
        %v1097 = vld [vmem:[%s7 + $0x48] sm:$0xff]
        %v1098 = vld [vmem:[%s7 + $0x50] sm:$0xff]
        %v1099 = vld [vmem:[%s7 + $0x58] sm:$0xff]
        %v1100 = vld [vmem:[%s7 + $0x60] sm:$0xff]
        %v1101 = vld [vmem:[%s7 + $0x68] sm:$0xff]
        %v1102 = vld [vmem:[%s7 + $0x70] sm:$0xff]
        %v1103 = vld [vmem:[%s7 + $0x78] sm:$0xff]
        %v1104 = vld [vmem:[%s7 + $0x80] sm:$0xff]
        %v1105 = vld [vmem:[%s7 + $0x88] sm:$0xff]
        %v1106 = vld [vmem:[%s7 + $0x90] sm:$0xff]
        %v1107 = vld [vmem:[%s7 + $0x98] sm:$0xff]
        %v1108 = vld [vmem:[%s7 + $0xa0] sm:$0xff]
        %v1109 = vld [vmem:[%s7 + $0xa8] sm:$0xff]
        %v1110 = vld [vmem:[%s7 + $0xb0] sm:$0xff]
        %v1111 = vld [vmem:[%s7 + $0xb8] sm:$0xff]
        %v1112 = vld [vmem:[%s7 + $0xc0] sm:$0xff]
        %v1113 = vld [vmem:[%s7 + $0xc8] sm:$0xff]
        %v1114 = vld [vmem:[%s7 + $0xd0] sm:$0xff]
        %v1115 = vld [vmem:[%s7 + $0xd8] sm:$0xff]
        %v1116 = vld [vmem:[%s7 + $0xe0] sm:$0xff]
        %v1117 = vld [vmem:[%s7 + $0xe8] sm:$0xff]
        %v1118 = vld [vmem:[%s7 + $0xf0] sm:$0xff]
        %v1119 = vld [vmem:[%s7 + $0xf8] sm:$0xff]
        %v1120 = vld [vmem:[%s7 + $0x100] sm:$0xff]
        %v1121 = vld [vmem:[%s7 + $0x108] sm:$0xff]
        %v1122 = vld [vmem:[%s7 + $0x110] sm:$0xff]
        %v1123 = vld [vmem:[%s7 + $0x118] sm:$0xff]
        %v1124 = vld [vmem:[%s7 + $0x120] sm:$0xff]
        %v1125 = vld [vmem:[%s7 + $0x128] sm:$0xff]
        %v1126 = vld [vmem:[%s7 + $0x130] sm:$0xff]
        %v1127 = vld [vmem:[%s7 + $0x138] sm:$0xff]
        %v1128 = vld [vmem:[%s7 + $0x140] sm:$0xff]
        %v1129 = vld [vmem:[%s7 + $0x148] sm:$0xff]
        %v1130 = vld [vmem:[%s7 + $0x150] sm:$0xff]
        %v1131 = vld [vmem:[%s7 + $0x158] sm:$0xff]
        %v1132 = vld [vmem:[%s7 + $0x160] sm:$0xff]
        %v1133 = vld [vmem:[%s7 + $0x168] sm:$0xff]
        %v1134 = vld [vmem:[%s7 + $0x170] sm:$0xff]
        %v1135 = vld [vmem:[%s7 + $0x178] sm:$0xff]
        %v1136 = vld [vmem:[%s7 + $0x180] sm:$0xff]
        %v1137 = vld [vmem:[%s7 + $0x188] sm:$0xff]
        %v1138 = vld [vmem:[%s7 + $0x190] sm:$0xff]
        %v1139 = vld [vmem:[%s7 + $0x198] sm:$0xff]
        %v1140 = vld [vmem:[%s7 + $0x1a0] sm:$0xff]
        %v1141 = vld [vmem:[%s7 + $0x1a8] sm:$0xff]
        %v1142 = vld [vmem:[%s7 + $0x1b0] sm:$0xff]
        %v1143 = vld [vmem:[%s7 + $0x1b8] sm:$0xff]
        %v1144 = vld [vmem:[%s7 + $0x1c0] sm:$0xff]
        %v1145 = vld [vmem:[%s7 + $0x1c8] sm:$0xff]
        %v1146 = vld [vmem:[%s7 + $0x1d0] sm:$0xff]
        %v1147 = vld [vmem:[%s7 + $0x1d8] sm:$0xff]
        %v1148 = vld [vmem:[%s7 + $0x1e0] sm:$0xff]
        %v1149 = vld [vmem:[%s7 + $0x1e8] sm:$0xff]
        %v1150 = vld [vmem:[%s7 + $0x1f0] sm:$0xff]
        %v1151 = vld [vmem:[%s7 + $0x1f8] sm:$0xff]
        %v1152 = vld [vmem:[%s7 + $0x200] sm:$0xff]
        %v1153 = vld [vmem:[%s7 + $0x208] sm:$0xff]
        %v1154 = vld [vmem:[%s7 + $0x210] sm:$0xff]
        %v1155 = vld [vmem:[%s7 + $0x218] sm:$0xff]
        %v1156 = vld [vmem:[%s7 + $0x220] sm:$0xff]
        %v1157 = vld [vmem:[%s7 + $0x228] sm:$0xff]
        %v1158 = vld [vmem:[%s7 + $0x230] sm:$0xff]
        %v1159 = vld [vmem:[%s7 + $0x238] sm:$0xff]
        %v1160 = vld [vmem:[%s7 + $0x240] sm:$0xff]
        %v1161 = vld [vmem:[%s7 + $0x248] sm:$0xff]
        %v1162 = vld [vmem:[%s7 + $0x250] sm:$0xff]
        %v1163 = vld [vmem:[%s7 + $0x258] sm:$0xff]
        %v1164 = vld [vmem:[%s7 + $0x260] sm:$0xff]
        %v1165 = vld [vmem:[%s7 + $0x268] sm:$0xff]
        %v1166 = vld [vmem:[%s7 + $0x270] sm:$0xff]
        %v1167 = vld [vmem:[%s7 + $0x278] sm:$0xff]
        %v1168 = vld [vmem:[%s7 + $0x280] sm:$0xff]
        %v1169 = vld [vmem:[%s7 + $0x288] sm:$0xff]
        %v1170 = vld [vmem:[%s7 + $0x290] sm:$0xff]
        %v1171 = vld [vmem:[%s7 + $0x298] sm:$0xff]
        %v1172 = vld [vmem:[%s7 + $0x2a0] sm:$0xff]
        %v1173 = vld [vmem:[%s7 + $0x2a8] sm:$0xff]
        %v1174 = vld [vmem:[%s7 + $0x2b0] sm:$0xff]
        %v1175 = vld [vmem:[%s7 + $0x2b8] sm:$0xff]
        %v1176 = vld [vmem:[%s7 + $0x2c0] sm:$0xff]
        %v1177 = vld [vmem:[%s7 + $0x2c8] sm:$0xff]
        %v1178 = vld [vmem:[%s7 + $0x2d0] sm:$0xff]
        %v1179 = vld [vmem:[%s7 + $0x2d8] sm:$0xff]
        %v1180 = vld [vmem:[%s7 + $0x2e0] sm:$0xff]
        %v1181 = vld [vmem:[%s7 + $0x2e8] sm:$0xff]
        %v1182 = vld [vmem:[%s7 + $0x2f0] sm:$0xff]
        %v1183 = vld [vmem:[%s7 + $0x2f8] sm:$0xff]
        %v1184 = vld [vmem:[%s8] sm:$0x3]
        %v1186 = vlaneseq
        %v1187 = vshrl.u32 %v1186, 7
        %v1188 = vsub.s32 0, %v1187
        %v1189 = vrot.slane %v1184, %v1188
        %v1190 = vlaneseq
        %v1191 = vshrl.u32 %v1190, 7
        %v1192 = vsub.s32 1, %v1191
        %v1193 = vrot.slane %v1184, %v1192
        %v1292 = vunpack.c.l.b16 %v1088
        %v1293 = vunpack.c.h.b16 %v1088
        %v1294 = vunpack.c.l.b16 %v1089
        %v1295 = vunpack.c.h.b16 %v1089
        %v1296 = vunpack.c.l.b16 %v1090
        %v1297 = vunpack.c.h.b16 %v1090
        %v1298 = vunpack.c.l.b16 %v1091
        %v1299 = vunpack.c.h.b16 %v1091
        %v1300 = vunpack.c.l.b16 %v1092
        %v1301 = vunpack.c.h.b16 %v1092
        %v1302 = vunpack.c.l.b16 %v1093
        %v1303 = vunpack.c.h.b16 %v1093
        %v1304 = vunpack.c.l.b16 %v1094
        %v1305 = vunpack.c.h.b16 %v1094
        %v1306 = vunpack.c.l.b16 %v1095
        %v1307 = vunpack.c.h.b16 %v1095
        %v1308 = vunpack.c.l.b16 %v1096
        %v1309 = vunpack.c.h.b16 %v1096
        %v1310 = vunpack.c.l.b16 %v1097
        %v1311 = vunpack.c.h.b16 %v1097
        %v1312 = vunpack.c.l.b16 %v1098
        %v1313 = vunpack.c.h.b16 %v1098
        %v1314 = vunpack.c.l.b16 %v1099
        %v1315 = vunpack.c.h.b16 %v1099
        %v1316 = vunpack.c.l.b16 %v1100
        %v1317 = vunpack.c.h.b16 %v1100
        %v1318 = vunpack.c.l.b16 %v1101
        %v1319 = vunpack.c.h.b16 %v1101
        %v1320 = vunpack.c.l.b16 %v1102
        %v1321 = vunpack.c.h.b16 %v1102
        %v1322 = vunpack.c.l.b16 %v1103
        %v1323 = vunpack.c.h.b16 %v1103
        %v1324 = vunpack.c.l.b16 %v1104
        %v1325 = vunpack.c.h.b16 %v1104
        %v1326 = vunpack.c.l.b16 %v1105
        %v1327 = vunpack.c.h.b16 %v1105
        %v1328 = vunpack.c.l.b16 %v1106
        %v1329 = vunpack.c.h.b16 %v1106
        %v1330 = vunpack.c.l.b16 %v1107
        %v1331 = vunpack.c.h.b16 %v1107
        %v1332 = vunpack.c.l.b16 %v1108
        %v1333 = vunpack.c.h.b16 %v1108
        %v1334 = vunpack.c.l.b16 %v1109
        %v1335 = vunpack.c.h.b16 %v1109
        %v1336 = vunpack.c.l.b16 %v1110
        %v1337 = vunpack.c.h.b16 %v1110
        %v1338 = vunpack.c.l.b16 %v1111
        %v1339 = vunpack.c.h.b16 %v1111
        %v1340 = vunpack.c.l.b16 %v1112
        %v1341 = vunpack.c.h.b16 %v1112
        %v1342 = vunpack.c.l.b16 %v1113
        %v1343 = vunpack.c.h.b16 %v1113
        %v1344 = vunpack.c.l.b16 %v1114
        %v1345 = vunpack.c.h.b16 %v1114
        %v1346 = vunpack.c.l.b16 %v1115
        %v1347 = vunpack.c.h.b16 %v1115
        %v1348 = vunpack.c.l.b16 %v1116
        %v1349 = vunpack.c.h.b16 %v1116
        %v1350 = vunpack.c.l.b16 %v1117
        %v1351 = vunpack.c.h.b16 %v1117
        %v1352 = vunpack.c.l.b16 %v1118
        %v1353 = vunpack.c.h.b16 %v1118
        %v1354 = vunpack.c.l.b16 %v1119
        %v1355 = vunpack.c.h.b16 %v1119
        %v1356 = vunpack.c.l.b16 %v1120
        %v1357 = vunpack.c.h.b16 %v1120
        %v1358 = vunpack.c.l.b16 %v1121
        %v1359 = vunpack.c.h.b16 %v1121
        %v1360 = vunpack.c.l.b16 %v1122
        %v1361 = vunpack.c.h.b16 %v1122
        %v1362 = vunpack.c.l.b16 %v1123
        %v1363 = vunpack.c.h.b16 %v1123
        %v1364 = vunpack.c.l.b16 %v1124
        %v1365 = vunpack.c.h.b16 %v1124
        %v1366 = vunpack.c.l.b16 %v1125
        %v1367 = vunpack.c.h.b16 %v1125
        %v1368 = vunpack.c.l.b16 %v1126
        %v1369 = vunpack.c.h.b16 %v1126
        %v1370 = vunpack.c.l.b16 %v1127
        %v1371 = vunpack.c.h.b16 %v1127
        %v1372 = vunpack.c.l.b16 %v1128
        %v1373 = vunpack.c.h.b16 %v1128
        %v1374 = vunpack.c.l.b16 %v1129
        %v1375 = vunpack.c.h.b16 %v1129
        %v1376 = vunpack.c.l.b16 %v1130
        %v1377 = vunpack.c.h.b16 %v1130
        %v1378 = vunpack.c.l.b16 %v1131
        %v1379 = vunpack.c.h.b16 %v1131
        %v1380 = vunpack.c.l.b16 %v1132
        %v1381 = vunpack.c.h.b16 %v1132
        %v1382 = vunpack.c.l.b16 %v1133
        %v1383 = vunpack.c.h.b16 %v1133
        %v1384 = vunpack.c.l.b16 %v1134
        %v1385 = vunpack.c.h.b16 %v1134
        %v1386 = vunpack.c.l.b16 %v1135
        %v1387 = vunpack.c.h.b16 %v1135
        %v1388 = vunpack.c.l.b16 %v1136
        %v1389 = vunpack.c.h.b16 %v1136
        %v1390 = vunpack.c.l.b16 %v1137
        %v1391 = vunpack.c.h.b16 %v1137
        %v1392 = vunpack.c.l.b16 %v1138
        %v1393 = vunpack.c.h.b16 %v1138
        %v1394 = vunpack.c.l.b16 %v1139
        %v1395 = vunpack.c.h.b16 %v1139
        %v1396 = vunpack.c.l.b16 %v1140
        %v1397 = vunpack.c.h.b16 %v1140
        %v1398 = vunpack.c.l.b16 %v1141
        %v1399 = vunpack.c.h.b16 %v1141
        %v1400 = vunpack.c.l.b16 %v1142
        %v1401 = vunpack.c.h.b16 %v1142
        %v1402 = vunpack.c.l.b16 %v1143
        %v1403 = vunpack.c.h.b16 %v1143
        %v1404 = vunpack.c.l.b16 %v1144
        %v1405 = vunpack.c.h.b16 %v1144
        %v1406 = vunpack.c.l.b16 %v1145
        %v1407 = vunpack.c.h.b16 %v1145
        %v1408 = vunpack.c.l.b16 %v1146
        %v1409 = vunpack.c.h.b16 %v1146
        %v1410 = vunpack.c.l.b16 %v1147
        %v1411 = vunpack.c.h.b16 %v1147
        %v1412 = vunpack.c.l.b16 %v1148
        %v1413 = vunpack.c.h.b16 %v1148
        %v1414 = vunpack.c.l.b16 %v1149
        %v1415 = vunpack.c.h.b16 %v1149
        %v1416 = vunpack.c.l.b16 %v1150
        %v1417 = vunpack.c.h.b16 %v1150
        %v1418 = vunpack.c.l.b16 %v1151
        %v1419 = vunpack.c.h.b16 %v1151
        %v1420 = vunpack.c.l.b16 %v1152
        %v1421 = vunpack.c.h.b16 %v1152
        %v1422 = vunpack.c.l.b16 %v1153
        %v1423 = vunpack.c.h.b16 %v1153
        %v1424 = vunpack.c.l.b16 %v1154
        %v1425 = vunpack.c.h.b16 %v1154
        %v1426 = vunpack.c.l.b16 %v1155
        %v1427 = vunpack.c.h.b16 %v1155
        %v1428 = vunpack.c.l.b16 %v1156
        %v1429 = vunpack.c.h.b16 %v1156
        %v1430 = vunpack.c.l.b16 %v1157
        %v1431 = vunpack.c.h.b16 %v1157
        %v1432 = vunpack.c.l.b16 %v1158
        %v1433 = vunpack.c.h.b16 %v1158
        %v1434 = vunpack.c.l.b16 %v1159
        %v1435 = vunpack.c.h.b16 %v1159
        %v1436 = vunpack.c.l.b16 %v1160
        %v1437 = vunpack.c.h.b16 %v1160
        %v1438 = vunpack.c.l.b16 %v1161
        %v1439 = vunpack.c.h.b16 %v1161
        %v1440 = vunpack.c.l.b16 %v1162
        %v1441 = vunpack.c.h.b16 %v1162
        %v1442 = vunpack.c.l.b16 %v1163
        %v1443 = vunpack.c.h.b16 %v1163
        %v1444 = vunpack.c.l.b16 %v1164
        %v1445 = vunpack.c.h.b16 %v1164
        %v1446 = vunpack.c.l.b16 %v1165
        %v1447 = vunpack.c.h.b16 %v1165
        %v1448 = vunpack.c.l.b16 %v1166
        %v1449 = vunpack.c.h.b16 %v1166
        %v1450 = vunpack.c.l.b16 %v1167
        %v1451 = vunpack.c.h.b16 %v1167
        %v1452 = vunpack.c.l.b16 %v1168
        %v1453 = vunpack.c.h.b16 %v1168
        %v1454 = vunpack.c.l.b16 %v1169
        %v1455 = vunpack.c.h.b16 %v1169
        %v1456 = vunpack.c.l.b16 %v1170
        %v1457 = vunpack.c.h.b16 %v1170
        %v1458 = vunpack.c.l.b16 %v1171
        %v1459 = vunpack.c.h.b16 %v1171
        %v1460 = vunpack.c.l.b16 %v1172
        %v1461 = vunpack.c.h.b16 %v1172
        %v1462 = vunpack.c.l.b16 %v1173
        %v1463 = vunpack.c.h.b16 %v1173
        %v1464 = vunpack.c.l.b16 %v1174
        %v1465 = vunpack.c.h.b16 %v1174
        %v1466 = vunpack.c.l.b16 %v1175
        %v1467 = vunpack.c.h.b16 %v1175
        %v1468 = vunpack.c.l.b16 %v1176
        %v1469 = vunpack.c.h.b16 %v1176
        %v1470 = vunpack.c.l.b16 %v1177
        %v1471 = vunpack.c.h.b16 %v1177
        %v1472 = vunpack.c.l.b16 %v1178
        %v1473 = vunpack.c.h.b16 %v1178
        %v1474 = vunpack.c.l.b16 %v1179
        %v1475 = vunpack.c.h.b16 %v1179
        %v1476 = vunpack.c.l.b16 %v1180
        %v1477 = vunpack.c.h.b16 %v1180
        %v1478 = vunpack.c.l.b16 %v1181
        %v1479 = vunpack.c.h.b16 %v1181
        %v1480 = vunpack.c.l.b16 %v1182
        %v1481 = vunpack.c.h.b16 %v1182
        %v1482 = vunpack.c.l.b16 %v1183
        %v1483 = vunpack.c.h.b16 %v1183
        %v1484 = vpack.c.b16 %v1294, %v1292
        %v1485 = vpack.c.b16 %v1295, %v1293
        %v1486 = vpack.c.b16 %v1298, %v1296
        %v1487 = vpack.c.b16 %v1299, %v1297
        %v1488 = vpack.c.b16 %v1302, %v1300
        %v1489 = vpack.c.b16 %v1303, %v1301
        %v1490 = vpack.c.b16 %v1306, %v1304
        %v1491 = vpack.c.b16 %v1307, %v1305
        %v1492 = vpack.c.b16 %v1310, %v1308
        %v1493 = vpack.c.b16 %v1311, %v1309
        %v1494 = vpack.c.b16 %v1314, %v1312
        %v1495 = vpack.c.b16 %v1315, %v1313
        %v1496 = vpack.c.b16 %v1318, %v1316
        %v1497 = vpack.c.b16 %v1319, %v1317
        %v1498 = vpack.c.b16 %v1322, %v1320
        %v1499 = vpack.c.b16 %v1323, %v1321
        %v1500 = vpack.c.b16 %v1326, %v1324
        %v1501 = vpack.c.b16 %v1327, %v1325
        %v1502 = vpack.c.b16 %v1330, %v1328
        %v1503 = vpack.c.b16 %v1331, %v1329
        %v1504 = vpack.c.b16 %v1334, %v1332
        %v1505 = vpack.c.b16 %v1335, %v1333
        %v1506 = vpack.c.b16 %v1338, %v1336
        %v1507 = vpack.c.b16 %v1339, %v1337
        %v1508 = vpack.c.b16 %v1342, %v1340
        %v1509 = vpack.c.b16 %v1343, %v1341
        %v1510 = vpack.c.b16 %v1346, %v1344
        %v1511 = vpack.c.b16 %v1347, %v1345
        %v1512 = vpack.c.b16 %v1350, %v1348
        %v1513 = vpack.c.b16 %v1351, %v1349
        %v1514 = vpack.c.b16 %v1354, %v1352
        %v1515 = vpack.c.b16 %v1355, %v1353
        %v1516 = vpack.c.b16 %v1358, %v1356
        %v1517 = vpack.c.b16 %v1359, %v1357
        %v1518 = vpack.c.b16 %v1362, %v1360
        %v1519 = vpack.c.b16 %v1363, %v1361
        %v1520 = vpack.c.b16 %v1366, %v1364
        %v1521 = vpack.c.b16 %v1367, %v1365
        %v1522 = vpack.c.b16 %v1370, %v1368
        %v1523 = vpack.c.b16 %v1371, %v1369
        %v1524 = vpack.c.b16 %v1374, %v1372
        %v1525 = vpack.c.b16 %v1375, %v1373
        %v1526 = vpack.c.b16 %v1378, %v1376
        %v1527 = vpack.c.b16 %v1379, %v1377
        %v1528 = vpack.c.b16 %v1382, %v1380
        %v1529 = vpack.c.b16 %v1383, %v1381
        %v1530 = vpack.c.b16 %v1386, %v1384
        %v1531 = vpack.c.b16 %v1387, %v1385
        %v1532 = vpack.c.b16 %v1390, %v1388
        %v1533 = vpack.c.b16 %v1391, %v1389
        %v1534 = vpack.c.b16 %v1394, %v1392
        %v1535 = vpack.c.b16 %v1395, %v1393
        %v1536 = vpack.c.b16 %v1398, %v1396
        %v1537 = vpack.c.b16 %v1399, %v1397
        %v1538 = vpack.c.b16 %v1402, %v1400
        %v1539 = vpack.c.b16 %v1403, %v1401
        %v1540 = vpack.c.b16 %v1406, %v1404
        %v1541 = vpack.c.b16 %v1407, %v1405
        %v1542 = vpack.c.b16 %v1410, %v1408
        %v1543 = vpack.c.b16 %v1411, %v1409
        %v1544 = vpack.c.b16 %v1414, %v1412
        %v1545 = vpack.c.b16 %v1415, %v1413
        %v1546 = vpack.c.b16 %v1418, %v1416
        %v1547 = vpack.c.b16 %v1419, %v1417
        %v1548 = vpack.c.b16 %v1422, %v1420
        %v1549 = vpack.c.b16 %v1423, %v1421
        %v1550 = vpack.c.b16 %v1426, %v1424
        %v1551 = vpack.c.b16 %v1427, %v1425
        %v1552 = vpack.c.b16 %v1430, %v1428
        %v1553 = vpack.c.b16 %v1431, %v1429
        %v1554 = vpack.c.b16 %v1434, %v1432
        %v1555 = vpack.c.b16 %v1435, %v1433
        %v1556 = vpack.c.b16 %v1438, %v1436
        %v1557 = vpack.c.b16 %v1439, %v1437
        %v1558 = vpack.c.b16 %v1442, %v1440
        %v1559 = vpack.c.b16 %v1443, %v1441
        %v1560 = vpack.c.b16 %v1446, %v1444
        %v1561 = vpack.c.b16 %v1447, %v1445
        %v1562 = vpack.c.b16 %v1450, %v1448
        %v1563 = vpack.c.b16 %v1451, %v1449
        %v1564 = vpack.c.b16 %v1454, %v1452
        %v1565 = vpack.c.b16 %v1455, %v1453
        %v1566 = vpack.c.b16 %v1458, %v1456
        %v1567 = vpack.c.b16 %v1459, %v1457
        %v1568 = vpack.c.b16 %v1462, %v1460
        %v1569 = vpack.c.b16 %v1463, %v1461
        %v1570 = vpack.c.b16 %v1466, %v1464
        %v1571 = vpack.c.b16 %v1467, %v1465
        %v1572 = vpack.c.b16 %v1470, %v1468
        %v1573 = vpack.c.b16 %v1471, %v1469
        %v1574 = vpack.c.b16 %v1474, %v1472
        %v1575 = vpack.c.b16 %v1475, %v1473
        %v1576 = vpack.c.b16 %v1478, %v1476
        %v1577 = vpack.c.b16 %v1479, %v1477
        %v1578 = vpack.c.b16 %v1482, %v1480
        %v1579 = vpack.c.b16 %v1483, %v1481
        %1676 = vmatprep.subr.bf16.mxu0 %v1499
        %1677 = vmatpush1.bf16.msra.mxu0 %v1498
        %1678 = vmatprep.subr.bf16.mxu0 %v1497
        %1679 = vmatpush1.bf16.msra.mxu0 %v1496
        %1680 = vmatprep.subr.bf16.mxu0 %v1495
        %1681 = vmatpush1.bf16.msra.mxu0 %v1494
        %1682 = vmatprep.subr.bf16.mxu0 %v1493
        %1683 = vmatpush1.bf16.msra.mxu0 %v1492
        %1684 = vmatprep.subr.bf16.mxu0 %v1491
        %1685 = vmatpush1.bf16.msra.mxu0 %v1490
        %1686 = vmatprep.subr.bf16.mxu0 %v1489
        %1687 = vmatpush1.bf16.msra.mxu0 %v1488
        %1688 = vmatprep.subr.bf16.mxu0 %v1487
        %1689 = vmatpush1.bf16.msra.mxu0 %v1486
        %1690 = vmatprep.subr.bf16.mxu0 %v1485
        %1691 = vmatpush1.bf16.msra.mxu0 %v1484
        %1692 = vmatprep.subr.bf16.mxu0 %v1515
        %1693 = vmatpush2.bf16.msra.mxu0 %v1514
        %1694 = vmatprep.subr.bf16.mxu0 %v1513
        %1695 = vmatpush2.bf16.msra.mxu0 %v1512
        %1696 = vmatprep.subr.bf16.mxu0 %v1511
        %1697 = vmatpush2.bf16.msra.mxu0 %v1510
        %1698 = vmatprep.subr.bf16.mxu0 %v1509
        %1699 = vmatpush2.bf16.msra.mxu0 %v1508
        %1700 = vmatprep.subr.bf16.mxu0 %v1507
        %1701 = vmatpush2.bf16.msra.mxu0 %v1506
        %1702 = vmatprep.subr.bf16.mxu0 %v1505
        %1703 = vmatpush2.bf16.msra.mxu0 %v1504
        %1704 = vmatprep.subr.bf16.mxu0 %v1503
        %1705 = vmatpush2.bf16.msra.mxu0 %v1502
        %1706 = vmatprep.subr.bf16.mxu0 %v1501
        %1707 = vmatpush2.bf16.msra.mxu0 %v1500
        %1708 = vmatprep.mubr.bf16.mxu0 %v1079
        %1709 = vmatmul.mubr.bf16.gmra.mxu0 %v1078
        %v1710 = vpop.f32.mrf.mxu0
        %v1711 = vadd.f32 %v1189, %v1710
        %v1712 = vpop.f32.mrf.mxu0
        %v1713 = vadd.f32 %v1193, %v1712
        %v1714 = vpop.f32.mrf.mxu0
        %v1715 = vadd.f32 %v1189, %v1714
        %v1716 = vpop.f32.mrf.mxu0
        %v1717 = vadd.f32 %v1193, %v1716
        %1718 = vdwg.mxu0
        %1719 = vmatprep.subr.bf16.mxu0 %v1531
        %1720 = vmatpush1.bf16.msra.mxu0 %v1530
        %1721 = vmatprep.subr.bf16.mxu0 %v1529
        %1722 = vmatpush1.bf16.msra.mxu0 %v1528
        %1723 = vmatprep.subr.bf16.mxu0 %v1527
        %1724 = vmatpush1.bf16.msra.mxu0 %v1526
        %1725 = vmatprep.subr.bf16.mxu0 %v1525
        %1726 = vmatpush1.bf16.msra.mxu0 %v1524
        %1727 = vmatprep.subr.bf16.mxu0 %v1523
        %1728 = vmatpush1.bf16.msra.mxu0 %v1522
        %1729 = vmatprep.subr.bf16.mxu0 %v1521
        %1730 = vmatpush1.bf16.msra.mxu0 %v1520
        %1731 = vmatprep.subr.bf16.mxu0 %v1519
        %1732 = vmatpush1.bf16.msra.mxu0 %v1518
        %1733 = vmatprep.subr.bf16.mxu0 %v1517
        %1734 = vmatpush1.bf16.msra.mxu0 %v1516
        %1735 = vmatprep.subr.bf16.mxu0 %v1547
        %1736 = vmatpush2.bf16.msra.mxu0 %v1546
        %1737 = vmatprep.subr.bf16.mxu0 %v1545
        %1738 = vmatpush2.bf16.msra.mxu0 %v1544
        %1739 = vmatprep.subr.bf16.mxu0 %v1543
        %1740 = vmatpush2.bf16.msra.mxu0 %v1542
        %1741 = vmatprep.subr.bf16.mxu0 %v1541
        %1742 = vmatpush2.bf16.msra.mxu0 %v1540
        %1743 = vmatprep.subr.bf16.mxu0 %v1539
        %1744 = vmatpush2.bf16.msra.mxu0 %v1538
        %1745 = vmatprep.subr.bf16.mxu0 %v1537
        %1746 = vmatpush2.bf16.msra.mxu0 %v1536
        %1747 = vmatprep.subr.bf16.mxu0 %v1535
        %1748 = vmatpush2.bf16.msra.mxu0 %v1534
        %1749 = vmatprep.subr.bf16.mxu0 %v1533
        %1750 = vmatpush2.bf16.msra.mxu0 %v1532
        %1751 = vmatprep.mubr.bf16.mxu0 %v1061
        %1752 = vmatmul.mubr.bf16.gmra.mxu0 %v1060
        %v1753 = vpop.f32.mrf.mxu0
        %v1754 = vadd.f32 %v1711, %v1753
        %v1755 = vpop.f32.mrf.mxu0
        %v1756 = vadd.f32 %v1713, %v1755
        %v1757 = vpop.f32.mrf.mxu0
        %v1758 = vadd.f32 %v1715, %v1757
        %v1759 = vpop.f32.mrf.mxu0
        %v1760 = vadd.f32 %v1717, %v1759
        %1761 = vdwg.mxu0
        %1762 = vmatprep.subr.bf16.mxu0 %v1563
        %1763 = vmatpush1.bf16.msra.mxu0 %v1562
        %1764 = vmatprep.subr.bf16.mxu0 %v1561
        %1765 = vmatpush1.bf16.msra.mxu0 %v1560
        %1766 = vmatprep.subr.bf16.mxu0 %v1559
        %1767 = vmatpush1.bf16.msra.mxu0 %v1558
        %1768 = vmatprep.subr.bf16.mxu0 %v1557
        %1769 = vmatpush1.bf16.msra.mxu0 %v1556
        %1770 = vmatprep.subr.bf16.mxu0 %v1555
        %1771 = vmatpush1.bf16.msra.mxu0 %v1554
        %1772 = vmatprep.subr.bf16.mxu0 %v1553
        %1773 = vmatpush1.bf16.msra.mxu0 %v1552
        %1774 = vmatprep.subr.bf16.mxu0 %v1551
        %1775 = vmatpush1.bf16.msra.mxu0 %v1550
        %1776 = vmatprep.subr.bf16.mxu0 %v1549
        %1777 = vmatpush1.bf16.msra.mxu0 %v1548
        %1778 = vmatprep.subr.bf16.mxu0 %v1579
        %1779 = vmatpush2.bf16.msra.mxu0 %v1578
        %1780 = vmatprep.subr.bf16.mxu0 %v1577
        %1781 = vmatpush2.bf16.msra.mxu0 %v1576
        %1782 = vmatprep.subr.bf16.mxu0 %v1575
        %1783 = vmatpush2.bf16.msra.mxu0 %v1574
        %1784 = vmatprep.subr.bf16.mxu0 %v1573
        %1785 = vmatpush2.bf16.msra.mxu0 %v1572
        %1786 = vmatprep.subr.bf16.mxu0 %v1571
        %1787 = vmatpush2.bf16.msra.mxu0 %v1570
        %1788 = vmatprep.subr.bf16.mxu0 %v1569
        %1789 = vmatpush2.bf16.msra.mxu0 %v1568
        %1790 = vmatprep.subr.bf16.mxu0 %v1567
        %1791 = vmatpush2.bf16.msra.mxu0 %v1566
        %1792 = vmatprep.subr.bf16.mxu0 %v1565
        %1793 = vmatpush2.bf16.msra.mxu0 %v1564
        %1794 = vmatprep.mubr.bf16.mxu0 %v1087
        %1795 = vmatmul.mubr.bf16.gmra.mxu0 %v1086
        %v1796 = vpop.f32.mrf.mxu0
        %v1797 = vadd.f32 %v1754, %v1796
        %v1798 = vpop.f32.mrf.mxu0
        %v1799 = vadd.f32 %v1756, %v1798
        %v1800 = vpop.f32.mrf.mxu0
        %v1801 = vadd.f32 %v1758, %v1800
        %v1802 = vpop.f32.mrf.mxu0
        %v1803 = vadd.f32 %v1760, %v1802
        %1804 = vdwg.mxu0
        %v1805 = vmax.f32 %v1797, 0.0
        %v1806 = vmax.f32 %v1799, 0.0
        %v1807 = vmax.f32 %v1801, 0.0
        %v1808 = vmax.f32 %v1803, 0.0
        %v1809 = vpack.c.bf16 %v1807, %v1805
        %v1810 = vpack.c.bf16 %v1808, %v1806
        %v1812 = vshrl.u32 %v1809, 16
        %v1814 = vrot.slane %v1812, 7
        %v1815 = vshll.u32 %v1809, 16
        %v1817 = vor.u32 %v1814, %v1815
        %v1819 = vshrl.u32 %v1810, 16
        %v1821 = vrot.slane %v1819, 7
        %v1822 = vshll.u32 %v1810, 16
        %v1824 = vor.u32 %v1821, %v1822
        %v1827 = vsel %vm399, 0, %v1817
        %v1828 = vsel %vm399, 0, %v1824
        %v1829 = vrot.slane %v1815, 1
        %v1830 = vor.u32 %v1812, %v1829
        %v1831 = vrot.slane %v1822, 1
        %v1832 = vor.u32 %v1819, %v1831
        %v1835 = vsel %vm406, %v1830, 0
        %v1836 = vsel %vm406, %v1832, 0
        %v1837 = vld [vmem:[%s9] sm:$0xff]
        %v1838 = vld [vmem:[%s9 + $0x8] sm:$0xff]
        %v1839 = vld [vmem:[%s9 + $0x10] sm:$0xff]
        %v1840 = vld [vmem:[%s9 + $0x18] sm:$0xff]
        %v1841 = vld [vmem:[%s9 + $0x20] sm:$0xff]
        %v1842 = vld [vmem:[%s9 + $0x28] sm:$0xff]
        %v1843 = vld [vmem:[%s9 + $0x30] sm:$0xff]
        %v1844 = vld [vmem:[%s9 + $0x38] sm:$0xff]
        %v1845 = vld [vmem:[%s9 + $0x40] sm:$0xff]
        %v1846 = vld [vmem:[%s9 + $0x48] sm:$0xff]
        %v1847 = vld [vmem:[%s9 + $0x50] sm:$0xff]
        %v1848 = vld [vmem:[%s9 + $0x58] sm:$0xff]
        %v1849 = vld [vmem:[%s9 + $0x60] sm:$0xff]
        %v1850 = vld [vmem:[%s9 + $0x68] sm:$0xff]
        %v1851 = vld [vmem:[%s9 + $0x70] sm:$0xff]
        %v1852 = vld [vmem:[%s9 + $0x78] sm:$0xff]
        %v1853 = vld [vmem:[%s9 + $0x80] sm:$0xff]
        %v1854 = vld [vmem:[%s9 + $0x88] sm:$0xff]
        %v1855 = vld [vmem:[%s9 + $0x90] sm:$0xff]
        %v1856 = vld [vmem:[%s9 + $0x98] sm:$0xff]
        %v1857 = vld [vmem:[%s9 + $0xa0] sm:$0xff]
        %v1858 = vld [vmem:[%s9 + $0xa8] sm:$0xff]
        %v1859 = vld [vmem:[%s9 + $0xb0] sm:$0xff]
        %v1860 = vld [vmem:[%s9 + $0xb8] sm:$0xff]
        %v1861 = vld [vmem:[%s9 + $0xc0] sm:$0xff]
        %v1862 = vld [vmem:[%s9 + $0xc8] sm:$0xff]
        %v1863 = vld [vmem:[%s9 + $0xd0] sm:$0xff]
        %v1864 = vld [vmem:[%s9 + $0xd8] sm:$0xff]
        %v1865 = vld [vmem:[%s9 + $0xe0] sm:$0xff]
        %v1866 = vld [vmem:[%s9 + $0xe8] sm:$0xff]
        %v1867 = vld [vmem:[%s9 + $0xf0] sm:$0xff]
        %v1868 = vld [vmem:[%s9 + $0xf8] sm:$0xff]
        %v1869 = vld [vmem:[%s9 + $0x100] sm:$0xff]
        %v1870 = vld [vmem:[%s9 + $0x108] sm:$0xff]
        %v1871 = vld [vmem:[%s9 + $0x110] sm:$0xff]
        %v1872 = vld [vmem:[%s9 + $0x118] sm:$0xff]
        %v1873 = vld [vmem:[%s9 + $0x120] sm:$0xff]
        %v1874 = vld [vmem:[%s9 + $0x128] sm:$0xff]
        %v1875 = vld [vmem:[%s9 + $0x130] sm:$0xff]
        %v1876 = vld [vmem:[%s9 + $0x138] sm:$0xff]
        %v1877 = vld [vmem:[%s9 + $0x140] sm:$0xff]
        %v1878 = vld [vmem:[%s9 + $0x148] sm:$0xff]
        %v1879 = vld [vmem:[%s9 + $0x150] sm:$0xff]
        %v1880 = vld [vmem:[%s9 + $0x158] sm:$0xff]
        %v1881 = vld [vmem:[%s9 + $0x160] sm:$0xff]
        %v1882 = vld [vmem:[%s9 + $0x168] sm:$0xff]
        %v1883 = vld [vmem:[%s9 + $0x170] sm:$0xff]
        %v1884 = vld [vmem:[%s9 + $0x178] sm:$0xff]
        %v1885 = vld [vmem:[%s9 + $0x180] sm:$0xff]
        %v1886 = vld [vmem:[%s9 + $0x188] sm:$0xff]
        %v1887 = vld [vmem:[%s9 + $0x190] sm:$0xff]
        %v1888 = vld [vmem:[%s9 + $0x198] sm:$0xff]
        %v1889 = vld [vmem:[%s9 + $0x1a0] sm:$0xff]
        %v1890 = vld [vmem:[%s9 + $0x1a8] sm:$0xff]
        %v1891 = vld [vmem:[%s9 + $0x1b0] sm:$0xff]
        %v1892 = vld [vmem:[%s9 + $0x1b8] sm:$0xff]
        %v1893 = vld [vmem:[%s9 + $0x1c0] sm:$0xff]
        %v1894 = vld [vmem:[%s9 + $0x1c8] sm:$0xff]
        %v1895 = vld [vmem:[%s9 + $0x1d0] sm:$0xff]
        %v1896 = vld [vmem:[%s9 + $0x1d8] sm:$0xff]
        %v1897 = vld [vmem:[%s9 + $0x1e0] sm:$0xff]
        %v1898 = vld [vmem:[%s9 + $0x1e8] sm:$0xff]
        %v1899 = vld [vmem:[%s9 + $0x1f0] sm:$0xff]
        %v1900 = vld [vmem:[%s9 + $0x1f8] sm:$0xff]
        %v1901 = vld [vmem:[%s9 + $0x200] sm:$0xff]
        %v1902 = vld [vmem:[%s9 + $0x208] sm:$0xff]
        %v1903 = vld [vmem:[%s9 + $0x210] sm:$0xff]
        %v1904 = vld [vmem:[%s9 + $0x218] sm:$0xff]
        %v1905 = vld [vmem:[%s9 + $0x220] sm:$0xff]
        %v1906 = vld [vmem:[%s9 + $0x228] sm:$0xff]
        %v1907 = vld [vmem:[%s9 + $0x230] sm:$0xff]
        %v1908 = vld [vmem:[%s9 + $0x238] sm:$0xff]
        %v1909 = vld [vmem:[%s9 + $0x240] sm:$0xff]
        %v1910 = vld [vmem:[%s9 + $0x248] sm:$0xff]
        %v1911 = vld [vmem:[%s9 + $0x250] sm:$0xff]
        %v1912 = vld [vmem:[%s9 + $0x258] sm:$0xff]
        %v1913 = vld [vmem:[%s9 + $0x260] sm:$0xff]
        %v1914 = vld [vmem:[%s9 + $0x268] sm:$0xff]
        %v1915 = vld [vmem:[%s9 + $0x270] sm:$0xff]
        %v1916 = vld [vmem:[%s9 + $0x278] sm:$0xff]
        %v1917 = vld [vmem:[%s9 + $0x280] sm:$0xff]
        %v1918 = vld [vmem:[%s9 + $0x288] sm:$0xff]
        %v1919 = vld [vmem:[%s9 + $0x290] sm:$0xff]
        %v1920 = vld [vmem:[%s9 + $0x298] sm:$0xff]
        %v1921 = vld [vmem:[%s9 + $0x2a0] sm:$0xff]
        %v1922 = vld [vmem:[%s9 + $0x2a8] sm:$0xff]
        %v1923 = vld [vmem:[%s9 + $0x2b0] sm:$0xff]
        %v1924 = vld [vmem:[%s9 + $0x2b8] sm:$0xff]
        %v1925 = vld [vmem:[%s9 + $0x2c0] sm:$0xff]
        %v1926 = vld [vmem:[%s9 + $0x2c8] sm:$0xff]
        %v1927 = vld [vmem:[%s9 + $0x2d0] sm:$0xff]
        %v1928 = vld [vmem:[%s9 + $0x2d8] sm:$0xff]
        %v1929 = vld [vmem:[%s9 + $0x2e0] sm:$0xff]
        %v1930 = vld [vmem:[%s9 + $0x2e8] sm:$0xff]
        %v1931 = vld [vmem:[%s9 + $0x2f0] sm:$0xff]
        %v1932 = vld [vmem:[%s9 + $0x2f8] sm:$0xff]
        %v1933 = vld [vmem:[%s10] sm:$0x3]
        %v1935 = vlaneseq
        %v1936 = vshrl.u32 %v1935, 7
        %v1937 = vsub.s32 0, %v1936
        %v1938 = vrot.slane %v1933, %v1937
        %v1939 = vlaneseq
        %v1940 = vshrl.u32 %v1939, 7
        %v1941 = vsub.s32 1, %v1940
        %v1942 = vrot.slane %v1933, %v1941
        %v2041 = vunpack.c.l.b16 %v1837
        %v2042 = vunpack.c.h.b16 %v1837
        %v2043 = vunpack.c.l.b16 %v1838
        %v2044 = vunpack.c.h.b16 %v1838
        %v2045 = vunpack.c.l.b16 %v1839
        %v2046 = vunpack.c.h.b16 %v1839
        %v2047 = vunpack.c.l.b16 %v1840
        %v2048 = vunpack.c.h.b16 %v1840
        %v2049 = vunpack.c.l.b16 %v1841
        %v2050 = vunpack.c.h.b16 %v1841
        %v2051 = vunpack.c.l.b16 %v1842
        %v2052 = vunpack.c.h.b16 %v1842
        %v2053 = vunpack.c.l.b16 %v1843
        %v2054 = vunpack.c.h.b16 %v1843
        %v2055 = vunpack.c.l.b16 %v1844
        %v2056 = vunpack.c.h.b16 %v1844
        %v2057 = vunpack.c.l.b16 %v1845
        %v2058 = vunpack.c.h.b16 %v1845
        %v2059 = vunpack.c.l.b16 %v1846
        %v2060 = vunpack.c.h.b16 %v1846
        %v2061 = vunpack.c.l.b16 %v1847
        %v2062 = vunpack.c.h.b16 %v1847
        %v2063 = vunpack.c.l.b16 %v1848
        %v2064 = vunpack.c.h.b16 %v1848
        %v2065 = vunpack.c.l.b16 %v1849
        %v2066 = vunpack.c.h.b16 %v1849
        %v2067 = vunpack.c.l.b16 %v1850
        %v2068 = vunpack.c.h.b16 %v1850
        %v2069 = vunpack.c.l.b16 %v1851
        %v2070 = vunpack.c.h.b16 %v1851
        %v2071 = vunpack.c.l.b16 %v1852
        %v2072 = vunpack.c.h.b16 %v1852
        %v2073 = vunpack.c.l.b16 %v1853
        %v2074 = vunpack.c.h.b16 %v1853
        %v2075 = vunpack.c.l.b16 %v1854
        %v2076 = vunpack.c.h.b16 %v1854
        %v2077 = vunpack.c.l.b16 %v1855
        %v2078 = vunpack.c.h.b16 %v1855
        %v2079 = vunpack.c.l.b16 %v1856
        %v2080 = vunpack.c.h.b16 %v1856
        %v2081 = vunpack.c.l.b16 %v1857
        %v2082 = vunpack.c.h.b16 %v1857
        %v2083 = vunpack.c.l.b16 %v1858
        %v2084 = vunpack.c.h.b16 %v1858
        %v2085 = vunpack.c.l.b16 %v1859
        %v2086 = vunpack.c.h.b16 %v1859
        %v2087 = vunpack.c.l.b16 %v1860
        %v2088 = vunpack.c.h.b16 %v1860
        %v2089 = vunpack.c.l.b16 %v1861
        %v2090 = vunpack.c.h.b16 %v1861
        %v2091 = vunpack.c.l.b16 %v1862
        %v2092 = vunpack.c.h.b16 %v1862
        %v2093 = vunpack.c.l.b16 %v1863
        %v2094 = vunpack.c.h.b16 %v1863
        %v2095 = vunpack.c.l.b16 %v1864
        %v2096 = vunpack.c.h.b16 %v1864
        %v2097 = vunpack.c.l.b16 %v1865
        %v2098 = vunpack.c.h.b16 %v1865
        %v2099 = vunpack.c.l.b16 %v1866
        %v2100 = vunpack.c.h.b16 %v1866
        %v2101 = vunpack.c.l.b16 %v1867
        %v2102 = vunpack.c.h.b16 %v1867
        %v2103 = vunpack.c.l.b16 %v1868
        %v2104 = vunpack.c.h.b16 %v1868
        %v2105 = vunpack.c.l.b16 %v1869
        %v2106 = vunpack.c.h.b16 %v1869
        %v2107 = vunpack.c.l.b16 %v1870
        %v2108 = vunpack.c.h.b16 %v1870
        %v2109 = vunpack.c.l.b16 %v1871
        %v2110 = vunpack.c.h.b16 %v1871
        %v2111 = vunpack.c.l.b16 %v1872
        %v2112 = vunpack.c.h.b16 %v1872
        %v2113 = vunpack.c.l.b16 %v1873
        %v2114 = vunpack.c.h.b16 %v1873
        %v2115 = vunpack.c.l.b16 %v1874
        %v2116 = vunpack.c.h.b16 %v1874
        %v2117 = vunpack.c.l.b16 %v1875
        %v2118 = vunpack.c.h.b16 %v1875
        %v2119 = vunpack.c.l.b16 %v1876
        %v2120 = vunpack.c.h.b16 %v1876
        %v2121 = vunpack.c.l.b16 %v1877
        %v2122 = vunpack.c.h.b16 %v1877
        %v2123 = vunpack.c.l.b16 %v1878
        %v2124 = vunpack.c.h.b16 %v1878
        %v2125 = vunpack.c.l.b16 %v1879
        %v2126 = vunpack.c.h.b16 %v1879
        %v2127 = vunpack.c.l.b16 %v1880
        %v2128 = vunpack.c.h.b16 %v1880
        %v2129 = vunpack.c.l.b16 %v1881
        %v2130 = vunpack.c.h.b16 %v1881
        %v2131 = vunpack.c.l.b16 %v1882
        %v2132 = vunpack.c.h.b16 %v1882
        %v2133 = vunpack.c.l.b16 %v1883
        %v2134 = vunpack.c.h.b16 %v1883
        %v2135 = vunpack.c.l.b16 %v1884
        %v2136 = vunpack.c.h.b16 %v1884
        %v2137 = vunpack.c.l.b16 %v1885
        %v2138 = vunpack.c.h.b16 %v1885
        %v2139 = vunpack.c.l.b16 %v1886
        %v2140 = vunpack.c.h.b16 %v1886
        %v2141 = vunpack.c.l.b16 %v1887
        %v2142 = vunpack.c.h.b16 %v1887
        %v2143 = vunpack.c.l.b16 %v1888
        %v2144 = vunpack.c.h.b16 %v1888
        %v2145 = vunpack.c.l.b16 %v1889
        %v2146 = vunpack.c.h.b16 %v1889
        %v2147 = vunpack.c.l.b16 %v1890
        %v2148 = vunpack.c.h.b16 %v1890
        %v2149 = vunpack.c.l.b16 %v1891
        %v2150 = vunpack.c.h.b16 %v1891
        %v2151 = vunpack.c.l.b16 %v1892
        %v2152 = vunpack.c.h.b16 %v1892
        %v2153 = vunpack.c.l.b16 %v1893
        %v2154 = vunpack.c.h.b16 %v1893
        %v2155 = vunpack.c.l.b16 %v1894
        %v2156 = vunpack.c.h.b16 %v1894
        %v2157 = vunpack.c.l.b16 %v1895
        %v2158 = vunpack.c.h.b16 %v1895
        %v2159 = vunpack.c.l.b16 %v1896
        %v2160 = vunpack.c.h.b16 %v1896
        %v2161 = vunpack.c.l.b16 %v1897
        %v2162 = vunpack.c.h.b16 %v1897
        %v2163 = vunpack.c.l.b16 %v1898
        %v2164 = vunpack.c.h.b16 %v1898
        %v2165 = vunpack.c.l.b16 %v1899
        %v2166 = vunpack.c.h.b16 %v1899
        %v2167 = vunpack.c.l.b16 %v1900
        %v2168 = vunpack.c.h.b16 %v1900
        %v2169 = vunpack.c.l.b16 %v1901
        %v2170 = vunpack.c.h.b16 %v1901
        %v2171 = vunpack.c.l.b16 %v1902
        %v2172 = vunpack.c.h.b16 %v1902
        %v2173 = vunpack.c.l.b16 %v1903
        %v2174 = vunpack.c.h.b16 %v1903
        %v2175 = vunpack.c.l.b16 %v1904
        %v2176 = vunpack.c.h.b16 %v1904
        %v2177 = vunpack.c.l.b16 %v1905
        %v2178 = vunpack.c.h.b16 %v1905
        %v2179 = vunpack.c.l.b16 %v1906
        %v2180 = vunpack.c.h.b16 %v1906
        %v2181 = vunpack.c.l.b16 %v1907
        %v2182 = vunpack.c.h.b16 %v1907
        %v2183 = vunpack.c.l.b16 %v1908
        %v2184 = vunpack.c.h.b16 %v1908
        %v2185 = vunpack.c.l.b16 %v1909
        %v2186 = vunpack.c.h.b16 %v1909
        %v2187 = vunpack.c.l.b16 %v1910
        %v2188 = vunpack.c.h.b16 %v1910
        %v2189 = vunpack.c.l.b16 %v1911
        %v2190 = vunpack.c.h.b16 %v1911
        %v2191 = vunpack.c.l.b16 %v1912
        %v2192 = vunpack.c.h.b16 %v1912
        %v2193 = vunpack.c.l.b16 %v1913
        %v2194 = vunpack.c.h.b16 %v1913
        %v2195 = vunpack.c.l.b16 %v1914
        %v2196 = vunpack.c.h.b16 %v1914
        %v2197 = vunpack.c.l.b16 %v1915
        %v2198 = vunpack.c.h.b16 %v1915
        %v2199 = vunpack.c.l.b16 %v1916
        %v2200 = vunpack.c.h.b16 %v1916
        %v2201 = vunpack.c.l.b16 %v1917
        %v2202 = vunpack.c.h.b16 %v1917
        %v2203 = vunpack.c.l.b16 %v1918
        %v2204 = vunpack.c.h.b16 %v1918
        %v2205 = vunpack.c.l.b16 %v1919
        %v2206 = vunpack.c.h.b16 %v1919
        %v2207 = vunpack.c.l.b16 %v1920
        %v2208 = vunpack.c.h.b16 %v1920
        %v2209 = vunpack.c.l.b16 %v1921
        %v2210 = vunpack.c.h.b16 %v1921
        %v2211 = vunpack.c.l.b16 %v1922
        %v2212 = vunpack.c.h.b16 %v1922
        %v2213 = vunpack.c.l.b16 %v1923
        %v2214 = vunpack.c.h.b16 %v1923
        %v2215 = vunpack.c.l.b16 %v1924
        %v2216 = vunpack.c.h.b16 %v1924
        %v2217 = vunpack.c.l.b16 %v1925
        %v2218 = vunpack.c.h.b16 %v1925
        %v2219 = vunpack.c.l.b16 %v1926
        %v2220 = vunpack.c.h.b16 %v1926
        %v2221 = vunpack.c.l.b16 %v1927
        %v2222 = vunpack.c.h.b16 %v1927
        %v2223 = vunpack.c.l.b16 %v1928
        %v2224 = vunpack.c.h.b16 %v1928
        %v2225 = vunpack.c.l.b16 %v1929
        %v2226 = vunpack.c.h.b16 %v1929
        %v2227 = vunpack.c.l.b16 %v1930
        %v2228 = vunpack.c.h.b16 %v1930
        %v2229 = vunpack.c.l.b16 %v1931
        %v2230 = vunpack.c.h.b16 %v1931
        %v2231 = vunpack.c.l.b16 %v1932
        %v2232 = vunpack.c.h.b16 %v1932
        %v2233 = vpack.c.b16 %v2043, %v2041
        %v2234 = vpack.c.b16 %v2044, %v2042
        %v2235 = vpack.c.b16 %v2047, %v2045
        %v2236 = vpack.c.b16 %v2048, %v2046
        %v2237 = vpack.c.b16 %v2051, %v2049
        %v2238 = vpack.c.b16 %v2052, %v2050
        %v2239 = vpack.c.b16 %v2055, %v2053
        %v2240 = vpack.c.b16 %v2056, %v2054
        %v2241 = vpack.c.b16 %v2059, %v2057
        %v2242 = vpack.c.b16 %v2060, %v2058
        %v2243 = vpack.c.b16 %v2063, %v2061
        %v2244 = vpack.c.b16 %v2064, %v2062
        %v2245 = vpack.c.b16 %v2067, %v2065
        %v2246 = vpack.c.b16 %v2068, %v2066
        %v2247 = vpack.c.b16 %v2071, %v2069
        %v2248 = vpack.c.b16 %v2072, %v2070
        %v2249 = vpack.c.b16 %v2075, %v2073
        %v2250 = vpack.c.b16 %v2076, %v2074
        %v2251 = vpack.c.b16 %v2079, %v2077
        %v2252 = vpack.c.b16 %v2080, %v2078
        %v2253 = vpack.c.b16 %v2083, %v2081
        %v2254 = vpack.c.b16 %v2084, %v2082
        %v2255 = vpack.c.b16 %v2087, %v2085
        %v2256 = vpack.c.b16 %v2088, %v2086
        %v2257 = vpack.c.b16 %v2091, %v2089
        %v2258 = vpack.c.b16 %v2092, %v2090
        %v2259 = vpack.c.b16 %v2095, %v2093
        %v2260 = vpack.c.b16 %v2096, %v2094
        %v2261 = vpack.c.b16 %v2099, %v2097
        %v2262 = vpack.c.b16 %v2100, %v2098
        %v2263 = vpack.c.b16 %v2103, %v2101
        %v2264 = vpack.c.b16 %v2104, %v2102
        %v2265 = vpack.c.b16 %v2107, %v2105
        %v2266 = vpack.c.b16 %v2108, %v2106
        %v2267 = vpack.c.b16 %v2111, %v2109
        %v2268 = vpack.c.b16 %v2112, %v2110
        %v2269 = vpack.c.b16 %v2115, %v2113
        %v2270 = vpack.c.b16 %v2116, %v2114
        %v2271 = vpack.c.b16 %v2119, %v2117
        %v2272 = vpack.c.b16 %v2120, %v2118
        %v2273 = vpack.c.b16 %v2123, %v2121
        %v2274 = vpack.c.b16 %v2124, %v2122
        %v2275 = vpack.c.b16 %v2127, %v2125
        %v2276 = vpack.c.b16 %v2128, %v2126
        %v2277 = vpack.c.b16 %v2131, %v2129
        %v2278 = vpack.c.b16 %v2132, %v2130
        %v2279 = vpack.c.b16 %v2135, %v2133
        %v2280 = vpack.c.b16 %v2136, %v2134
        %v2281 = vpack.c.b16 %v2139, %v2137
        %v2282 = vpack.c.b16 %v2140, %v2138
        %v2283 = vpack.c.b16 %v2143, %v2141
        %v2284 = vpack.c.b16 %v2144, %v2142
        %v2285 = vpack.c.b16 %v2147, %v2145
        %v2286 = vpack.c.b16 %v2148, %v2146
        %v2287 = vpack.c.b16 %v2151, %v2149
        %v2288 = vpack.c.b16 %v2152, %v2150
        %v2289 = vpack.c.b16 %v2155, %v2153
        %v2290 = vpack.c.b16 %v2156, %v2154
        %v2291 = vpack.c.b16 %v2159, %v2157
        %v2292 = vpack.c.b16 %v2160, %v2158
        %v2293 = vpack.c.b16 %v2163, %v2161
        %v2294 = vpack.c.b16 %v2164, %v2162
        %v2295 = vpack.c.b16 %v2167, %v2165
        %v2296 = vpack.c.b16 %v2168, %v2166
        %v2297 = vpack.c.b16 %v2171, %v2169
        %v2298 = vpack.c.b16 %v2172, %v2170
        %v2299 = vpack.c.b16 %v2175, %v2173
        %v2300 = vpack.c.b16 %v2176, %v2174
        %v2301 = vpack.c.b16 %v2179, %v2177
        %v2302 = vpack.c.b16 %v2180, %v2178
        %v2303 = vpack.c.b16 %v2183, %v2181
        %v2304 = vpack.c.b16 %v2184, %v2182
        %v2305 = vpack.c.b16 %v2187, %v2185
        %v2306 = vpack.c.b16 %v2188, %v2186
        %v2307 = vpack.c.b16 %v2191, %v2189
        %v2308 = vpack.c.b16 %v2192, %v2190
        %v2309 = vpack.c.b16 %v2195, %v2193
        %v2310 = vpack.c.b16 %v2196, %v2194
        %v2311 = vpack.c.b16 %v2199, %v2197
        %v2312 = vpack.c.b16 %v2200, %v2198
        %v2313 = vpack.c.b16 %v2203, %v2201
        %v2314 = vpack.c.b16 %v2204, %v2202
        %v2315 = vpack.c.b16 %v2207, %v2205
        %v2316 = vpack.c.b16 %v2208, %v2206
        %v2317 = vpack.c.b16 %v2211, %v2209
        %v2318 = vpack.c.b16 %v2212, %v2210
        %v2319 = vpack.c.b16 %v2215, %v2213
        %v2320 = vpack.c.b16 %v2216, %v2214
        %v2321 = vpack.c.b16 %v2219, %v2217
        %v2322 = vpack.c.b16 %v2220, %v2218
        %v2323 = vpack.c.b16 %v2223, %v2221
        %v2324 = vpack.c.b16 %v2224, %v2222
        %v2325 = vpack.c.b16 %v2227, %v2225
        %v2326 = vpack.c.b16 %v2228, %v2226
        %v2327 = vpack.c.b16 %v2231, %v2229
        %v2328 = vpack.c.b16 %v2232, %v2230
        %2425 = vmatprep.subr.bf16.mxu0 %v2248
        %2426 = vmatpush1.bf16.msra.mxu0 %v2247
        %2427 = vmatprep.subr.bf16.mxu0 %v2246
        %2428 = vmatpush1.bf16.msra.mxu0 %v2245
        %2429 = vmatprep.subr.bf16.mxu0 %v2244
        %2430 = vmatpush1.bf16.msra.mxu0 %v2243
        %2431 = vmatprep.subr.bf16.mxu0 %v2242
        %2432 = vmatpush1.bf16.msra.mxu0 %v2241
        %2433 = vmatprep.subr.bf16.mxu0 %v2240
        %2434 = vmatpush1.bf16.msra.mxu0 %v2239
        %2435 = vmatprep.subr.bf16.mxu0 %v2238
        %2436 = vmatpush1.bf16.msra.mxu0 %v2237
        %2437 = vmatprep.subr.bf16.mxu0 %v2236
        %2438 = vmatpush1.bf16.msra.mxu0 %v2235
        %2439 = vmatprep.subr.bf16.mxu0 %v2234
        %2440 = vmatpush1.bf16.msra.mxu0 %v2233
        %2441 = vmatprep.subr.bf16.mxu0 %v2264
        %2442 = vmatpush2.bf16.msra.mxu0 %v2263
        %2443 = vmatprep.subr.bf16.mxu0 %v2262
        %2444 = vmatpush2.bf16.msra.mxu0 %v2261
        %2445 = vmatprep.subr.bf16.mxu0 %v2260
        %2446 = vmatpush2.bf16.msra.mxu0 %v2259
        %2447 = vmatprep.subr.bf16.mxu0 %v2258
        %2448 = vmatpush2.bf16.msra.mxu0 %v2257
        %2449 = vmatprep.subr.bf16.mxu0 %v2256
        %2450 = vmatpush2.bf16.msra.mxu0 %v2255
        %2451 = vmatprep.subr.bf16.mxu0 %v2254
        %2452 = vmatpush2.bf16.msra.mxu0 %v2253
        %2453 = vmatprep.subr.bf16.mxu0 %v2252
        %2454 = vmatpush2.bf16.msra.mxu0 %v2251
        %2455 = vmatprep.subr.bf16.mxu0 %v2250
        %2456 = vmatpush2.bf16.msra.mxu0 %v2249
        %2457 = vmatprep.mubr.bf16.mxu0 %v1828
        %2458 = vmatmul.mubr.bf16.gmra.mxu0 %v1827
        %v2459 = vpop.f32.mrf.mxu0
        %v2460 = vadd.f32 %v1938, %v2459
        %v2461 = vpop.f32.mrf.mxu0
        %v2462 = vadd.f32 %v1942, %v2461
        %v2463 = vpop.f32.mrf.mxu0
        %v2464 = vadd.f32 %v1938, %v2463
        %v2465 = vpop.f32.mrf.mxu0
        %v2466 = vadd.f32 %v1942, %v2465
        %2467 = vdwg.mxu0
        %2468 = vmatprep.subr.bf16.mxu0 %v2280
        %2469 = vmatpush1.bf16.msra.mxu0 %v2279
        %2470 = vmatprep.subr.bf16.mxu0 %v2278
        %2471 = vmatpush1.bf16.msra.mxu0 %v2277
        %2472 = vmatprep.subr.bf16.mxu0 %v2276
        %2473 = vmatpush1.bf16.msra.mxu0 %v2275
        %2474 = vmatprep.subr.bf16.mxu0 %v2274
        %2475 = vmatpush1.bf16.msra.mxu0 %v2273
        %2476 = vmatprep.subr.bf16.mxu0 %v2272
        %2477 = vmatpush1.bf16.msra.mxu0 %v2271
        %2478 = vmatprep.subr.bf16.mxu0 %v2270
        %2479 = vmatpush1.bf16.msra.mxu0 %v2269
        %2480 = vmatprep.subr.bf16.mxu0 %v2268
        %2481 = vmatpush1.bf16.msra.mxu0 %v2267
        %2482 = vmatprep.subr.bf16.mxu0 %v2266
        %2483 = vmatpush1.bf16.msra.mxu0 %v2265
        %2484 = vmatprep.subr.bf16.mxu0 %v2296
        %2485 = vmatpush2.bf16.msra.mxu0 %v2295
        %2486 = vmatprep.subr.bf16.mxu0 %v2294
        %2487 = vmatpush2.bf16.msra.mxu0 %v2293
        %2488 = vmatprep.subr.bf16.mxu0 %v2292
        %2489 = vmatpush2.bf16.msra.mxu0 %v2291
        %2490 = vmatprep.subr.bf16.mxu0 %v2290
        %2491 = vmatpush2.bf16.msra.mxu0 %v2289
        %2492 = vmatprep.subr.bf16.mxu0 %v2288
        %2493 = vmatpush2.bf16.msra.mxu0 %v2287
        %2494 = vmatprep.subr.bf16.mxu0 %v2286
        %2495 = vmatpush2.bf16.msra.mxu0 %v2285
        %2496 = vmatprep.subr.bf16.mxu0 %v2284
        %2497 = vmatpush2.bf16.msra.mxu0 %v2283
        %2498 = vmatprep.subr.bf16.mxu0 %v2282
        %2499 = vmatpush2.bf16.msra.mxu0 %v2281
        %2500 = vmatprep.mubr.bf16.mxu0 %v1810
        %2501 = vmatmul.mubr.bf16.gmra.mxu0 %v1809
        %v2502 = vpop.f32.mrf.mxu0
        %v2503 = vadd.f32 %v2460, %v2502
        %v2504 = vpop.f32.mrf.mxu0
        %v2505 = vadd.f32 %v2462, %v2504
        %v2506 = vpop.f32.mrf.mxu0
        %v2507 = vadd.f32 %v2464, %v2506
        %v2508 = vpop.f32.mrf.mxu0
        %v2509 = vadd.f32 %v2466, %v2508
        %2510 = vdwg.mxu0
        %2511 = vmatprep.subr.bf16.mxu0 %v2312
        %2512 = vmatpush1.bf16.msra.mxu0 %v2311
        %2513 = vmatprep.subr.bf16.mxu0 %v2310
        %2514 = vmatpush1.bf16.msra.mxu0 %v2309
        %2515 = vmatprep.subr.bf16.mxu0 %v2308
        %2516 = vmatpush1.bf16.msra.mxu0 %v2307
        %2517 = vmatprep.subr.bf16.mxu0 %v2306
        %2518 = vmatpush1.bf16.msra.mxu0 %v2305
        %2519 = vmatprep.subr.bf16.mxu0 %v2304
        %2520 = vmatpush1.bf16.msra.mxu0 %v2303
        %2521 = vmatprep.subr.bf16.mxu0 %v2302
        %2522 = vmatpush1.bf16.msra.mxu0 %v2301
        %2523 = vmatprep.subr.bf16.mxu0 %v2300
        %2524 = vmatpush1.bf16.msra.mxu0 %v2299
        %2525 = vmatprep.subr.bf16.mxu0 %v2298
        %2526 = vmatpush1.bf16.msra.mxu0 %v2297
        %2527 = vmatprep.subr.bf16.mxu0 %v2328
        %2528 = vmatpush2.bf16.msra.mxu0 %v2327
        %2529 = vmatprep.subr.bf16.mxu0 %v2326
        %2530 = vmatpush2.bf16.msra.mxu0 %v2325
        %2531 = vmatprep.subr.bf16.mxu0 %v2324
        %2532 = vmatpush2.bf16.msra.mxu0 %v2323
        %2533 = vmatprep.subr.bf16.mxu0 %v2322
        %2534 = vmatpush2.bf16.msra.mxu0 %v2321
        %2535 = vmatprep.subr.bf16.mxu0 %v2320
        %2536 = vmatpush2.bf16.msra.mxu0 %v2319
        %2537 = vmatprep.subr.bf16.mxu0 %v2318
        %2538 = vmatpush2.bf16.msra.mxu0 %v2317
        %2539 = vmatprep.subr.bf16.mxu0 %v2316
        %2540 = vmatpush2.bf16.msra.mxu0 %v2315
        %2541 = vmatprep.subr.bf16.mxu0 %v2314
        %2542 = vmatpush2.bf16.msra.mxu0 %v2313
        %2543 = vmatprep.mubr.bf16.mxu0 %v1836
        %2544 = vmatmul.mubr.bf16.gmra.mxu0 %v1835
        %v2545 = vpop.f32.mrf.mxu0
        %v2546 = vadd.f32 %v2503, %v2545
        %v2547 = vpop.f32.mrf.mxu0
        %v2548 = vadd.f32 %v2505, %v2547
        %v2549 = vpop.f32.mrf.mxu0
        %v2550 = vadd.f32 %v2507, %v2549
        %v2551 = vpop.f32.mrf.mxu0
        %v2552 = vadd.f32 %v2509, %v2551
        %2553 = vdwg.mxu0
        %v2554 = vmax.f32 %v2546, 0.0
        %v2555 = vmax.f32 %v2548, 0.0
        %v2556 = vmax.f32 %v2550, 0.0
        %v2557 = vmax.f32 %v2552, 0.0
        %2558 = vst [vmem:[%s379] sm:$0xff] %v2554
        %2559 = vst [vmem:[%s379 + $0x8] sm:$0xff] %v2555
        %2560 = vst [vmem:[%s379 + $0x10] sm:$0xff] %v2556
        %2561 = vst [vmem:[%s379 + $0x18] sm:$0xff] %v2557
        %s2562 = sand.u32 %s269, 1
        %s2563 = scalar_lea.sflag [#allocation3], %s2562
        %s2564 = sand.u32 %s269, 1
        %s2565 = smul.addr %s2564, 32
        %s2566 = scalar_lea.vmem [#allocation2], %s2565
        // Predicated region
        $region65: #{convnet_forward.1} parent=63 // pred_check
          %p2567 = pneg %p279
        $region66: #{convnet_forward.1} parent=63 // pred_check_branch
          %2569 = sbr.rel (%p2567) target = $region68
        $region67: #{convnet_forward.1} parent=63 // pred_region
          %s2571 = ssub.s32 512, 512
          %2572 = vsyncadd %s2563, %s2571
          %s2573 = smul.addr %s25, 4
          %s2574 = smul.addr %s2573, 128
          %s2575 = scalar_lea.hbm %s11, %s2574
          %s2576 = sshll.u32 %s2566, 4
          %s2577 = int_to_ptr.vmem [resolvable:$true] %s2576
          %2582 = dma.vmem_to_hbm [thread:$0]  %s2577, 512, %s2575, %s2563, 256, 256, 16
        $region68: #{convnet_forward.1} parent=63 // pred_fallthru
          _
      $region64: #{convnet_forward.1} parent=5 // pred_fallthru
        _
      %p2583 = scmp.le.s32.totalorder 2, %s20
      // Predicated region
      $region69: #{convnet_forward.1} parent=5 // pred_check
        %p2584 = pneg %p2583
      $region70: #{convnet_forward.1} parent=5 // pred_check_branch
        %2586 = sbr.rel (%p2584) target = $region72
      $region71: #{convnet_forward.1} parent=5 // pred_region
        %s2587 = ssub.s32 %s20, 2
        // Predicated region
        $region73: #{convnet_forward.1} parent=71 // pred_check
          %p2588 = pneg %p285
        $region74: #{convnet_forward.1} parent=71 // pred_check_branch
          %2590 = sbr.rel (%p2588) target = $region76
        $region75: #{convnet_forward.1} parent=71 // pred_region
          %s2591 = sand.u32 %s270, 1
          %s2592 = scalar_lea.sflag [#allocation3], %s2591
          %s2593 = sand.u32 %s270, 1
          %s2594 = smul.addr %s2593, 32
          %s2595 = scalar_lea.vmem [#allocation2], %s2594
          %2596 = dma.done %s2592, 512
        $region76: #{convnet_forward.1} parent=71 // pred_fallthru
          _
      $region72: #{convnet_forward.1} parent=5 // pred_fallthru
        _
    $region6: #{convnet_forward.1} parent=1 // loop_footer
      %s24 = sadd.s32 1, %s20
    $region7: #{convnet_forward.1} parent=1 // loop_footer_branch
      %19 = sbr.rel target = $region3
    $region8: #{convnet_forward.1} parent=1 // loop_exit
      _
    %2597 = vsyncpa [#allocation3], 1
    %s2598 = scalar_lea.sflag [#allocation3], 1
    %2599 = vsyncpa %s2598, 1

</llo_original>
